<compile_context>
chip_gen: v7x
topology: tpu7x:2x2x1
jax: 0.10.0
libtpu: 0.0.40
codegen_flags: <defaults>
</compile_context>

<pallas_src>
import math

import jax
import jax.numpy as jnp
from jax.experimental import pallas as pl
from jax.experimental.pallas import tpu as pltpu

NUM_HEADS = 12          # hard-coded in the reference module
LN_EPS = 1e-5           # nn.LayerNorm default


def _make_kernel(num_heads, layers_per_step):
    def kernel(x_ref, t_ref, mask_ref, wqkv_ref, wo_ref, small_ref, o_ref):
        lb = pl.program_id(1)

        BB, L, E = o_ref.shape
        HL = mask_ref.shape[0]          # num_heads * L
        Ep = wqkv_ref.shape[-1] // 3    # lane-padded per-projection width
        M = BB * L
        dh = E // num_heads
        scale = 1.0 / math.sqrt(dh)

        # Fresh input once per batch block; afterwards the activation lives in the
        # output block (constant block index over the layer axis -> VMEM-resident,
        # single HBM writeback per batch block).
        @pl.when(lb == 0)
        def _():
            o_ref[...] = x_ref[...]

        # Hoisted per-step constants (loop-invariant across the layer sub-loop).
        t_full = jnp.broadcast_to(
            t_ref[...].reshape(1, L, E), (BB, L, E)).reshape(M, E)     # (M, E) f32
        maskf = mask_ref[...]                                          # (HL, E) f32
        mask_bf = maskf.astype(jnp.bfloat16)

        def layer_norm(y, gamma, beta):
            mu = jnp.mean(y, axis=-1, keepdims=True)
            d = y - mu
            var = jnp.mean(d * d, axis=-1, keepdims=True)
            return d * jax.lax.rsqrt(var + LN_EPS) * gamma + beta

        def one_layer(y2d, w_qkv, w_o, small):
            bq = small[0:1, :]
            bk = small[1:2, :]
            bv = small[2:3, :]
            bo = small[3:4, :]
            gamma = small[4:5, :]
            beta = small[5:6, :]

            # x = x + timestep_embedding
            x1 = y2d + t_full                                          # (M, E) f32
            x1_bf = x1.astype(jnp.bfloat16)

            # Fused q/k/v projection: one MXU matmul, slices on 128-lane boundaries.
            qkv = jnp.dot(x1_bf, w_qkv,
                          preferred_element_type=jnp.float32)          # (M, 3*Ep)
            q = (qkv[:, 0:E] + bq) * scale                             # scale folded in
            k = qkv[:, Ep:Ep + E] + bk
            v = qkv[:, 2 * Ep:2 * Ep + E] + bv

            # Head-stacked masked K / V: row r = h*L + j holds k[j] on head h's
            # Dh lanes and 0 elsewhere (broadcast + mask, no 12-way concatenate).
            def stack_heads(a2d):
                a4 = jnp.broadcast_to(a2d.reshape(BB, 1, L, E),
                                      (BB, num_heads, L, E))
                return (a4.reshape(BB, HL, E) * maskf[None]).astype(jnp.bfloat16)

            k_st = stack_heads(k)                                      # (BB, HL, E) bf16
            v_st = stack_heads(v)                                      # (BB, HL, E) bf16
            q_bf = q.reshape(BB, L, E).astype(jnp.bfloat16)

            # Per-head scores for all heads in ONE batched MXU matmul: (BB, L, HL),
            # column r = h*L + j is head h's score against position j.
            s = jnp.einsum('bie,bre->bir', q_bf, k_st,
                           preferred_element_type=jnp.float32)
            # Softmax per head group of L columns.  Stabilize with the global row
            # max (shift-invariant -> identical softmax; avoids a lane->sublane
            # reshape for a per-group max).
            s = s - jnp.max(s, axis=-1, keepdims=True)
            es = jnp.exp(s)                                            # (BB, L, HL) f32

            # Numerator: one matmul contracting over HL = 96 -> (BB, L, E) directly.
            num = jnp.einsum('bir,bre->bie', es.astype(jnp.bfloat16), v_st,
                             preferred_element_type=jnp.float32).reshape(M, E)
            # Per-output-lane softmax denominator via the head mask (lane e gets
            # its own head's sum) -> normalize AFTER the value matmul.
            den = jnp.dot(es.reshape(M, HL).astype(jnp.bfloat16), mask_bf,
                          preferred_element_type=jnp.float32)          # (M, E)
            attn = num / den                                           # (M, E) f32

            attn_out = jnp.dot(attn.astype(jnp.bfloat16), w_o,
                               preferred_element_type=jnp.float32) + bo

            # residual + LayerNorm + timestep embedding + LayerNorm.
            # (The reference's MLP branch output is dead code -> not computed.)
            x2 = x1 + attn_out
            x3 = layer_norm(x2, gamma, beta)
            x4 = x3 + t_full
            return layer_norm(x4, gamma, beta)

        y = o_ref[...].reshape(M, E)
        for j in range(layers_per_step):        # unrolled sub-loop over layer block
            y = one_layer(y, wqkv_ref[j], wo_ref[j], small_ref[j])
        o_ref[...] = y.reshape(BB, L, E)

    return kernel


def _pack_params(layer_params, E, Ep):
    """Stack per-layer weights; fuse q/k/v onto 128-lane-aligned columns and pack
    the six small (E,) vectors per layer into one (6, E) slab (one DMA per step)."""
    wqkv = jnp.stack([p["wqkv"] for p in layer_params])         # (Ln, 3, E, E)
    Ln = wqkv.shape[0]
    wqkv_f = jnp.zeros((Ln, E, 3 * Ep), jnp.float32)
    for i in range(3):
        wqkv_f = wqkv_f.at[:, :, i * Ep:i * Ep + E].set(wqkv[:, i])
    wqkv_f = wqkv_f.astype(jnp.bfloat16)

    wo = jnp.stack([p["wo"] for p in layer_params]).astype(jnp.bfloat16)   # (Ln, E, E)

    small = jnp.stack([
        jnp.stack([p["bqkv"][0], p["bqkv"][1], p["bqkv"][2],
                   p["bo"], p["gamma"], p["beta"]])
        for p in layer_params])                                  # (Ln, 6, E) f32
    return wqkv_f, wo, small


def transformer_backbone_pallas(x, t_emb, layer_params, *,
                                batch_block=None, layers_per_step=None):
    """Full backbone in one fused pallas_call."""
    N, L, E = x.shape
    num_layers = len(layer_params)
    assert E % NUM_HEADS == 0
    dh = E // NUM_HEADS

    # >=2 batch blocks by default so the "parallel" axis can use both v7x cores.
    if batch_block is None:
        batch_block = N // 2 if (N % 2 == 0 and N >= 2) else N
    assert N % batch_block == 0
    nb = N // batch_block

    # Block the layer axis: fewer grid steps / DMA descriptors per layer.
    if layers_per_step is None:
        layers_per_step = next(k for k in (4, 3, 2, 1) if num_layers % k == 0)
    assert num_layers % layers_per_step == 0
    n_layer_blocks = num_layers // layers_per_step

    Ep = ((E + 127) // 128) * 128
    HL = NUM_HEADS * L

    wqkv_f, wo, small = _pack_params(layer_params, E, Ep)

    # Constant head-membership mask (hoisted out of the kernel body): row r = h*L+j
    # belongs to head h = r // L; lane e belongs to head e // dh.
    mask = (jnp.arange(HL)[:, None] // L ==
            jnp.arange(E)[None, :] // dh).astype(jnp.float32)    # (HL, E)

    in_specs = [
        pl.BlockSpec((batch_block, L, E), lambda b, l: (b, 0, 0)),        # x
        pl.BlockSpec((L, E), lambda b, l: (0, 0)),                        # timestep emb
        pl.BlockSpec((HL, E), lambda b, l: (0, 0)),                       # head mask
        pl.BlockSpec((layers_per_step, E, 3 * Ep), lambda b, l: (l, 0, 0)),  # fused Wqkv
        pl.BlockSpec((layers_per_step, E, E), lambda b, l: (l, 0, 0)),       # Wout
        pl.BlockSpec((layers_per_step, 6, E), lambda b, l: (l, 0, 0)),       # packed small params
    ]
    out_spec = pl.BlockSpec((batch_block, L, E), lambda b, l: (b, 0, 0))

    # Explicit VMEM budget (activation block + double/triple-buffered weight blocks
    # + resident constants), clamped to stay within v7x's 64 MiB physical VMEM.
    act = batch_block * L * E * 4
    wblk = layers_per_step * (E * 3 * Ep * 2 + E * E * 2 + 6 * E * 4)
    const = HL * E * 4 + L * E * 4
    vmem = 4 * act + 3 * wblk + 2 * const + (8 << 20)
    vmem = int(min(max(vmem, 16 << 20), 64 << 20))

    kernel = _make_kernel(NUM_HEADS, layers_per_step)

    return pl.pallas_call(
        kernel,
        out_shape=jax.ShapeDtypeStruct((N, L, E), jnp.float32),
        grid_spec=pltpu.PrefetchScalarGridSpec(
            num_scalar_prefetch=0,
            grid=(nb, n_layer_blocks),
            in_specs=in_specs,
            out_specs=out_spec,
        ),
        compiler_params=pltpu.CompilerParams(
            dimension_semantics=("parallel", "arbitrary"),
            vmem_limit_bytes=vmem),
    )(x, t_emb, mask, wqkv_f, wo, small)


# ---------------- deterministic parameter init (synthetic) ----------------
def init_layer_params(key, E):
    ks = jax.random.split(key, 4)
    bound = 1.0 / math.sqrt(E)

    def u(k, shape):
        return jax.random.uniform(k, shape, jnp.float32, -bound, bound)

    return {
        "wqkv": u(ks[0], (3, E, E)),    # q/k/v weights, each pre-transposed (in, out)
        "bqkv": u(ks[1], (3, E)),
        "wo": u(ks[2], (E, E)),
        "bo": u(ks[3], (E,)),
        "gamma": jnp.ones((E,), jnp.float32),
        "beta": jnp.zeros((E,), jnp.float32),
        # MLP weights intentionally omitted: the reference discards mlp_output.
    }


# ---------------- pure-JAX reference (f32) for verification ----------------
def layer_ref(x, t, p):
    N, L, E = x.shape
    Dh = E // NUM_HEADS
    x1 = x + t[None]
    q = x1 @ p["wqkv"][0] + p["bqkv"][0]
    k = x1 @ p["wqkv"][1] + p["bqkv"][1]
    v = x1 @ p["wqkv"][2] + p["bqkv"][2]

    def split_heads(a):
        return a.reshape(N, L, NUM_HEADS, Dh).transpose(0, 2, 1, 3)

    qh, kh, vh = map(split_heads, (q, k, v))
    s = jnp.einsum('nhld,nhmd->nhlm', qh, kh) / math.sqrt(Dh)
    pr = jax.nn.softmax(s, axis=-1)
    a = jnp.einsum('nhlm,nhmd->nhld', pr, vh).transpose(0, 2, 1, 3).reshape(N, L, E)
    attn_out = a @ p["wo"] + p["bo"]

    def ln(y):
        mu = y.mean(-1, keepdims=True)
        var = ((y - mu) ** 2).mean(-1, keepdims=True)
        return (y - mu) / jnp.sqrt(var + LN_EPS) * p["gamma"] + p["beta"]

    x2 = x1 + attn_out
    x4 = ln(x2) + t[None]
    return ln(x4)       # the MLP output is discarded in the reference module


if __name__ == "__main__":
    N, L, E = 2, 8, 96          # 12 heads -> head_dim = 8
    num_layers = 2

    key = jax.random.PRNGKey(0)
    k_x, k_t, k_p = jax.random.split(key, 3)
    x = jax.random.normal(k_x, (N, L, E), jnp.float32)
    t_emb = 0.02 * jax.random.normal(k_t, (L, E), jnp.float32)
    layer_params = [init_layer_params(k, E) for k in jax.random.split(k_p, num_layers)]

    out = jax.block_until_ready(transformer_backbone_pallas(x, t_emb, layer_params))

    ref = x
    for p in layer_params:
        ref = layer_ref(ref, t_emb, p)

    assert out.shape == (N, L, E)
    max_err = float(jnp.max(jnp.abs(out - ref)))
    assert max_err < 5e-2, f"max_err={max_err}"   # bf16 matmuls vs f32 reference
    print("KERNEL_OK")
</pallas_src>

<mosaic_0001>
module attributes {stable_mosaic.version = 11 : i64} {
  func.func @kernel(%arg0: i32, %arg1: i32, %arg2: memref<1x8x96xf32, #tpu.memory_space<vmem>>, %arg3: memref<8x96xf32, #tpu.memory_space<vmem>>, %arg4: memref<96x96xf32, #tpu.memory_space<vmem>>, %arg5: memref<2x96x384xbf16, #tpu.memory_space<vmem>>, %arg6: memref<2x96x96xbf16, #tpu.memory_space<vmem>>, %arg7: memref<2x6x96xf32, #tpu.memory_space<vmem>>, %arg8: memref<1x8x96xf32, #tpu.memory_space<vmem>>) attributes {dimension_semantics = [#tpu.dimension_semantics<parallel>, #tpu.dimension_semantics<arbitrary>], iteration_bounds = array<i64: 2, 1>, scalar_prefetch = 0 : i64, scratch_operands = 0 : i64, tpu.core_type = #tpu.core_type<tc>, window_params = [{transform_indices = @transform_0, window_bounds = array<i64: 1, 8, 96>}, {pipeline_mode = #tpu.pipeline_mode<synchronous>, transform_indices = @transform_1, window_bounds = array<i64: 8, 96>}, {pipeline_mode = #tpu.pipeline_mode<synchronous>, transform_indices = @transform_2, window_bounds = array<i64: 96, 96>}, {transform_indices = @transform_3, window_bounds = array<i64: 2, 96, 384>}, {transform_indices = @transform_4, window_bounds = array<i64: 2, 96, 96>}, {transform_indices = @transform_5, window_bounds = array<i64: 2, 6, 96>}, {transform_indices = @transform_6, window_bounds = array<i64: 1, 8, 96>}]} {
    %c0_i32 = arith.constant 0 : i32
    %0 = arith.cmpi eq, %arg1, %c0_i32 : i32
    %1 = arith.extui %0 : i1 to i32
    %c0_i32_0 = arith.constant 0 : i32
    %2 = arith.cmpi ne, %1, %c0_i32_0 : i32
    scf.if %2 {
      %c0_60 = arith.constant 0 : index
      %c0_61 = arith.constant 0 : index
      %c0_62 = arith.constant 0 : index
      %214 = vector.load %arg2[%c0_60, %c0_61, %c0_62] : memref<1x8x96xf32, #tpu.memory_space<vmem>>, vector<1x8x96xf32>
      %c0_63 = arith.constant 0 : index
      %c0_64 = arith.constant 0 : index
      %c0_65 = arith.constant 0 : index
      %215 = vector.load %arg8[%c0_63, %c0_64, %c0_65] : memref<1x8x96xf32, #tpu.memory_space<vmem>>, vector<1x8x96xf32>
      tpu.vector_store %arg8[%c0_63, %c0_64, %c0_65], %214 {strides = array<i32>} : memref<1x8x96xf32, #tpu.memory_space<vmem>>, vector<1x8x96xf32>,
    } else {
    }
    %c0 = arith.constant 0 : index
    %c0_1 = arith.constant 0 : index
    %3 = vector.load %arg3[%c0, %c0_1] : memref<8x96xf32, #tpu.memory_space<vmem>>, vector<8x96xf32>
    %4 = vector.shape_cast %3 : vector<8x96xf32> to vector<1x8x96xf32>
    %5 = vector.shape_cast %4 : vector<1x8x96xf32> to vector<8x96xf32>
    %c0_2 = arith.constant 0 : index
    %c0_3 = arith.constant 0 : index
    %6 = vector.load %arg4[%c0_2, %c0_3] : memref<96x96xf32, #tpu.memory_space<vmem>>, vector<96x96xf32>
    %7 = arith.truncf %6 : vector<96x96xf32> to vector<96x96xbf16>
    %c0_4 = arith.constant 0 : index
    %c0_5 = arith.constant 0 : index
    %c0_6 = arith.constant 0 : index
    %8 = vector.load %arg8[%c0_4, %c0_5, %c0_6] : memref<1x8x96xf32, #tpu.memory_space<vmem>>, vector<1x8x96xf32>
    %9 = vector.shape_cast %8 : vector<1x8x96xf32> to vector<8x96xf32>
    %c0_7 = arith.constant 0 : index
    %c0_8 = arith.constant 0 : index
    %c0_9 = arith.constant 0 : index
    %10 = vector.load %arg5[%c0_7, %c0_8, %c0_9] : memref<2x96x384xbf16, #tpu.memory_space<vmem>>, vector<1x96x384xbf16>
    %11 = vector.shape_cast %10 : vector<1x96x384xbf16> to vector<96x384xbf16>
    %c0_10 = arith.constant 0 : index
    %c0_11 = arith.constant 0 : index
    %c0_12 = arith.constant 0 : index
    %12 = vector.load %arg6[%c0_10, %c0_11, %c0_12] : memref<2x96x96xbf16, #tpu.memory_space<vmem>>, vector<1x96x96xbf16>
    %13 = vector.shape_cast %12 : vector<1x96x96xbf16> to vector<96x96xbf16>
    %c0_13 = arith.constant 0 : index
    %c0_14 = arith.constant 0 : index
    %c0_15 = arith.constant 0 : index
    %14 = vector.load %arg7[%c0_13, %c0_14, %c0_15] : memref<2x6x96xf32, #tpu.memory_space<vmem>>, vector<1x6x96xf32>
    %15 = vector.shape_cast %14 : vector<1x6x96xf32> to vector<6x96xf32>
    %16 = vector.extract_strided_slice %15 {offsets = [0, 0], sizes = [1, 96], strides = [1, 1]} : vector<6x96xf32> to vector<1x96xf32>
    %17 = vector.extract_strided_slice %15 {offsets = [1, 0], sizes = [1, 96], strides = [1, 1]} : vector<6x96xf32> to vector<1x96xf32>
    %18 = vector.extract_strided_slice %15 {offsets = [2, 0], sizes = [1, 96], strides = [1, 1]} : vector<6x96xf32> to vector<1x96xf32>
    %19 = vector.extract_strided_slice %15 {offsets = [3, 0], sizes = [1, 96], strides = [1, 1]} : vector<6x96xf32> to vector<1x96xf32>
    %20 = vector.extract_strided_slice %15 {offsets = [4, 0], sizes = [1, 96], strides = [1, 1]} : vector<6x96xf32> to vector<1x96xf32>
    %21 = vector.extract_strided_slice %15 {offsets = [5, 0], sizes = [1, 96], strides = [1, 1]} : vector<6x96xf32> to vector<1x96xf32>
    %22 = arith.addf %9, %5 : vector<8x96xf32>
    %23 = arith.truncf %22 : vector<8x96xf32> to vector<8x96xbf16>
    %cst = arith.constant dense<0.000000e+00> : vector<8x384xf32>
    %24 = tpu.matmul %23, %11, %cst {dimension_numbers = #tpu.dot_dimension_numbers<[1], [0], [0], [1], [0, 0, 1, 1], [], []>} : vector<8x96xbf16>, vector<96x384xbf16>, vector<8x384xf32> -> vector<8x384xf32>
    %25 = vector.extract_strided_slice %24 {offsets = [0, 0], sizes = [8, 96], strides = [1, 1]} : vector<8x384xf32> to vector<8x96xf32>
    %26 = vector.broadcast %16 : vector<1x96xf32> to vector<8x96xf32>
    %27 = arith.addf %25, %26 : vector<8x96xf32>
    %cst_16 = arith.constant 0.353553385 : f32
    %28 = vector.broadcast %cst_16 : f32 to vector<8x96xf32>
    %29 = arith.mulf %27, %28 : vector<8x96xf32>
    %30 = vector.extract_strided_slice %24 {offsets = [0, 128], sizes = [8, 96], strides = [1, 1]} : vector<8x384xf32> to vector<8x96xf32>
    %31 = vector.broadcast %17 : vector<1x96xf32> to vector<8x96xf32>
    %32 = arith.addf %30, %31 : vector<8x96xf32>
    %33 = vector.extract_strided_slice %24 {offsets = [0, 256], sizes = [8, 96], strides = [1, 1]} : vector<8x384xf32> to vector<8x96xf32>
    %34 = vector.broadcast %18 : vector<1x96xf32> to vector<8x96xf32>
    %35 = arith.addf %33, %34 : vector<8x96xf32>
    %36 = vector.shape_cast %32 : vector<8x96xf32> to vector<1x1x8x96xf32>
    %37 = vector.shape_cast %36 : vector<1x1x8x96xf32> to vector<1x1x8x96xf32>
    %38 = vector.broadcast %37 : vector<1x1x8x96xf32> to vector<1x12x8x96xf32>
    %39 = vector.shape_cast %38 : vector<1x12x8x96xf32> to vector<1x96x96xf32>
    %40 = vector.shape_cast %6 : vector<96x96xf32> to vector<1x96x96xf32>
    %41 = arith.mulf %39, %40 : vector<1x96x96xf32>
    %42 = arith.truncf %41 : vector<1x96x96xf32> to vector<1x96x96xbf16>
    %43 = vector.shape_cast %35 : vector<8x96xf32> to vector<1x1x8x96xf32>
    %44 = vector.shape_cast %43 : vector<1x1x8x96xf32> to vector<1x1x8x96xf32>
    %45 = vector.broadcast %44 : vector<1x1x8x96xf32> to vector<1x12x8x96xf32>
    %46 = vector.shape_cast %45 : vector<1x12x8x96xf32> to vector<1x96x96xf32>
    %47 = vector.shape_cast %6 : vector<96x96xf32> to vector<1x96x96xf32>
    %48 = arith.mulf %46, %47 : vector<1x96x96xf32>
    %49 = arith.truncf %48 : vector<1x96x96xf32> to vector<1x96x96xbf16>
    %50 = vector.shape_cast %29 : vector<8x96xf32> to vector<1x8x96xf32>
    %51 = arith.truncf %50 : vector<1x8x96xf32> to vector<1x8x96xbf16>
    "tpu.trace_start"() <{level = 10 : i32, message = "bie,bre->bir"}> : () -> ()
    %cst_17 = arith.constant dense<0.000000e+00> : vector<1x8x96xf32>
    %52 = tpu.matmul %51, %42, %cst_17 {dimension_numbers = #tpu.dot_dimension_numbers<[2], [2], [1], [1], [0, 0, 0, 1, 1, 1], [0], [0]>} : vector<1x8x96xbf16>, vector<1x96x96xbf16>, vector<1x8x96xf32> -> vector<1x8x96xf32>
    "tpu.trace_stop"() : () -> ()
    %cst_18 = arith.constant dense<0xFF800000> : vector<1x8xf32>
    %53 = vector.multi_reduction <maximumf>, %52, %cst_18 [2] : vector<1x8x96xf32> to vector<1x8xf32>
    %54 = vector.shape_cast %53 : vector<1x8xf32> to vector<1x8x1xf32>
    %55 = vector.broadcast %54 : vector<1x8x1xf32> to vector<1x8x96xf32>
    %56 = arith.subf %52, %55 : vector<1x8x96xf32>
    %57 = math.exp %56 : vector<1x8x96xf32>
    %58 = arith.truncf %57 : vector<1x8x96xf32> to vector<1x8x96xbf16>
    "tpu.trace_start"() <{level = 10 : i32, message = "bir,bre->bie"}> : () -> ()
    %cst_19 = arith.constant dense<0.000000e+00> : vector<1x8x96xf32>
    %59 = tpu.matmul %58, %49, %cst_19 {dimension_numbers = #tpu.dot_dimension_numbers<[2], [1], [1], [2], [0, 0, 0, 1, 1, 2], [0], [0]>} : vector<1x8x96xbf16>, vector<1x96x96xbf16>, vector<1x8x96xf32> -> vector<1x8x96xf32>
    "tpu.trace_stop"() : () -> ()
    %60 = vector.shape_cast %59 : vector<1x8x96xf32> to vector<8x96xf32>
    %61 = vector.shape_cast %57 : vector<1x8x96xf32> to vector<8x96xf32>
    %62 = arith.truncf %61 : vector<8x96xf32> to vector<8x96xbf16>
    %cst_20 = arith.constant dense<0.000000e+00> : vector<8x96xf32>
    %63 = tpu.matmul %62, %7, %cst_20 {dimension_numbers = #tpu.dot_dimension_numbers<[1], [0], [0], [1], [0, 0, 1, 1], [], []>} : vector<8x96xbf16>, vector<96x96xbf16>, vector<8x96xf32> -> vector<8x96xf32>
    %64 = arith.divf %60, %63 : vector<8x96xf32>
    %65 = arith.truncf %64 : vector<8x96xf32> to vector<8x96xbf16>
    %cst_21 = arith.constant dense<0.000000e+00> : vector<8x96xf32>
    %66 = tpu.matmul %65, %13, %cst_21 {dimension_numbers = #tpu.dot_dimension_numbers<[1], [0], [0], [1], [0, 0, 1, 1], [], []>} : vector<8x96xbf16>, vector<96x96xbf16>, vector<8x96xf32> -> vector<8x96xf32>
    %67 = vector.broadcast %19 : vector<1x96xf32> to vector<8x96xf32>
    %68 = arith.addf %66, %67 : vector<8x96xf32>
    %69 = arith.addf %22, %68 : vector<8x96xf32>
    %cst_22 = arith.constant dense<0.000000e+00> : vector<8xf32>
    %70 = vector.multi_reduction <add>, %69, %cst_22 [1] : vector<8x96xf32> to vector<8xf32>
    %71 = vector.shape_cast %70 : vector<8xf32> to vector<8x1xf32>
    %cst_23 = arith.constant 9.600000e+01 : f32
    %72 = vector.broadcast %cst_23 : f32 to vector<8x1xf32>
    %73 = arith.divf %71, %72 : vector<8x1xf32>
    %74 = vector.broadcast %73 : vector<8x1xf32> to vector<8x96xf32>
    %75 = arith.subf %69, %74 : vector<8x96xf32>
    %76 = arith.mulf %75, %75 : vector<8x96xf32>
    %cst_24 = arith.constant dense<0.000000e+00> : vector<8xf32>
    %77 = vector.multi_reduction <add>, %76, %cst_24 [1] : vector<8x96xf32> to vector<8xf32>
    %78 = vector.shape_cast %77 : vector<8xf32> to vector<8x1xf32>
    %cst_25 = arith.constant 9.600000e+01 : f32
    %79 = vector.broadcast %cst_25 : f32 to vector<8x1xf32>
    %80 = arith.divf %78, %79 : vector<8x1xf32>
    %cst_26 = arith.constant 9.99999974E-6 : f32
    %81 = vector.broadcast %cst_26 : f32 to vector<8x1xf32>
    %82 = arith.addf %80, %81 : vector<8x1xf32>
    %83 = math.rsqrt %82 : vector<8x1xf32>
    %84 = vector.broadcast %83 : vector<8x1xf32> to vector<8x96xf32>
    %85 = arith.mulf %75, %84 : vector<8x96xf32>
    %86 = vector.broadcast %20 : vector<1x96xf32> to vector<8x96xf32>
    %87 = arith.mulf %85, %86 : vector<8x96xf32>
    %88 = vector.broadcast %21 : vector<1x96xf32> to vector<8x96xf32>
    %89 = arith.addf %87, %88 : vector<8x96xf32>
    %90 = arith.addf %89, %5 : vector<8x96xf32>
    %cst_27 = arith.constant dense<0.000000e+00> : vector<8xf32>
    %91 = vector.multi_reduction <add>, %90, %cst_27 [1] : vector<8x96xf32> to vector<8xf32>
    %92 = vector.shape_cast %91 : vector<8xf32> to vector<8x1xf32>
    %cst_28 = arith.constant 9.600000e+01 : f32
    %93 = vector.broadcast %cst_28 : f32 to vector<8x1xf32>
    %94 = arith.divf %92, %93 : vector<8x1xf32>
    %95 = vector.broadcast %94 : vector<8x1xf32> to vector<8x96xf32>
    %96 = arith.subf %90, %95 : vector<8x96xf32>
    %97 = arith.mulf %96, %96 : vector<8x96xf32>
    %cst_29 = arith.constant dense<0.000000e+00> : vector<8xf32>
    %98 = vector.multi_reduction <add>, %97, %cst_29 [1] : vector<8x96xf32> to vector<8xf32>
    %99 = vector.shape_cast %98 : vector<8xf32> to vector<8x1xf32>
    %cst_30 = arith.constant 9.600000e+01 : f32
    %100 = vector.broadcast %cst_30 : f32 to vector<8x1xf32>
    %101 = arith.divf %99, %100 : vector<8x1xf32>
    %cst_31 = arith.constant 9.99999974E-6 : f32
    %102 = vector.broadcast %cst_31 : f32 to vector<8x1xf32>
    %103 = arith.addf %101, %102 : vector<8x1xf32>
    %104 = math.rsqrt %103 : vector<8x1xf32>
    %105 = vector.broadcast %104 : vector<8x1xf32> to vector<8x96xf32>
    %106 = arith.mulf %96, %105 : vector<8x96xf32>
    %107 = vector.broadcast %20 : vector<1x96xf32> to vector<8x96xf32>
    %108 = arith.mulf %106, %107 : vector<8x96xf32>
    %109 = vector.broadcast %21 : vector<1x96xf32> to vector<8x96xf32>
    %110 = arith.addf %108, %109 : vector<8x96xf32>
    %c1 = arith.constant 1 : index
    %c0_32 = arith.constant 0 : index
    %c0_33 = arith.constant 0 : index
    %111 = vector.load %arg5[%c1, %c0_32, %c0_33] : memref<2x96x384xbf16, #tpu.memory_space<vmem>>, vector<1x96x384xbf16>
    %112 = vector.shape_cast %111 : vector<1x96x384xbf16> to vector<96x384xbf16>
    %c1_34 = arith.constant 1 : index
    %c0_35 = arith.constant 0 : index
    %c0_36 = arith.constant 0 : index
    %113 = vector.load %arg6[%c1_34, %c0_35, %c0_36] : memref<2x96x96xbf16, #tpu.memory_space<vmem>>, vector<1x96x96xbf16>
    %114 = vector.shape_cast %113 : vector<1x96x96xbf16> to vector<96x96xbf16>
    %c1_37 = arith.constant 1 : index
    %c0_38 = arith.constant 0 : index
    %c0_39 = arith.constant 0 : index
    %115 = vector.load %arg7[%c1_37, %c0_38, %c0_39] : memref<2x6x96xf32, #tpu.memory_space<vmem>>, vector<1x6x96xf32>
    %116 = vector.shape_cast %115 : vector<1x6x96xf32> to vector<6x96xf32>
    %117 = vector.extract_strided_slice %116 {offsets = [0, 0], sizes = [1, 96], strides = [1, 1]} : vector<6x96xf32> to vector<1x96xf32>
    %118 = vector.extract_strided_slice %116 {offsets = [1, 0], sizes = [1, 96], strides = [1, 1]} : vector<6x96xf32> to vector<1x96xf32>
    %119 = vector.extract_strided_slice %116 {offsets = [2, 0], sizes = [1, 96], strides = [1, 1]} : vector<6x96xf32> to vector<1x96xf32>
    %120 = vector.extract_strided_slice %116 {offsets = [3, 0], sizes = [1, 96], strides = [1, 1]} : vector<6x96xf32> to vector<1x96xf32>
    %121 = vector.extract_strided_slice %116 {offsets = [4, 0], sizes = [1, 96], strides = [1, 1]} : vector<6x96xf32> to vector<1x96xf32>
    %122 = vector.extract_strided_slice %116 {offsets = [5, 0], sizes = [1, 96], strides = [1, 1]} : vector<6x96xf32> to vector<1x96xf32>
    %123 = arith.addf %110, %5 : vector<8x96xf32>
    %124 = arith.truncf %123 : vector<8x96xf32> to vector<8x96xbf16>
    %cst_40 = arith.constant dense<0.000000e+00> : vector<8x384xf32>
    %125 = tpu.matmul %124, %112, %cst_40 {dimension_numbers = #tpu.dot_dimension_numbers<[1], [0], [0], [1], [0, 0, 1, 1], [], []>} : vector<8x96xbf16>, vector<96x384xbf16>, vector<8x384xf32> -> vector<8x384xf32>
    %126 = vector.extract_strided_slice %125 {offsets = [0, 0], sizes = [8, 96], strides = [1, 1]} : vector<8x384xf32> to vector<8x96xf32>
    %127 = vector.broadcast %117 : vector<1x96xf32> to vector<8x96xf32>
    %128 = arith.addf %126, %127 : vector<8x96xf32>
    %cst_41 = arith.constant 0.353553385 : f32
    %129 = vector.broadcast %cst_41 : f32 to vector<8x96xf32>
    %130 = arith.mulf %128, %129 : vector<8x96xf32>
    %131 = vector.extract_strided_slice %125 {offsets = [0, 128], sizes = [8, 96], strides = [1, 1]} : vector<8x384xf32> to vector<8x96xf32>
    %132 = vector.broadcast %118 : vector<1x96xf32> to vector<8x96xf32>
    %133 = arith.addf %131, %132 : vector<8x96xf32>
    %134 = vector.extract_strided_slice %125 {offsets = [0, 256], sizes = [8, 96], strides = [1, 1]} : vector<8x384xf32> to vector<8x96xf32>
    %135 = vector.broadcast %119 : vector<1x96xf32> to vector<8x96xf32>
    %136 = arith.addf %134, %135 : vector<8x96xf32>
    %137 = vector.shape_cast %133 : vector<8x96xf32> to vector<1x1x8x96xf32>
    %138 = vector.shape_cast %137 : vector<1x1x8x96xf32> to vector<1x1x8x96xf32>
    %139 = vector.broadcast %138 : vector<1x1x8x96xf32> to vector<1x12x8x96xf32>
    %140 = vector.shape_cast %139 : vector<1x12x8x96xf32> to vector<1x96x96xf32>
    %141 = vector.shape_cast %6 : vector<96x96xf32> to vector<1x96x96xf32>
    %142 = arith.mulf %140, %141 : vector<1x96x96xf32>
    %143 = arith.truncf %142 : vector<1x96x96xf32> to vector<1x96x96xbf16>
    %144 = vector.shape_cast %136 : vector<8x96xf32> to vector<1x1x8x96xf32>
    %145 = vector.shape_cast %144 : vector<1x1x8x96xf32> to vector<1x1x8x96xf32>
    %146 = vector.broadcast %145 : vector<1x1x8x96xf32> to vector<1x12x8x96xf32>
    %147 = vector.shape_cast %146 : vector<1x12x8x96xf32> to vector<1x96x96xf32>
    %148 = vector.shape_cast %6 : vector<96x96xf32> to vector<1x96x96xf32>
    %149 = arith.mulf %147, %148 : vector<1x96x96xf32>
    %150 = arith.truncf %149 : vector<1x96x96xf32> to vector<1x96x96xbf16>
    %151 = vector.shape_cast %130 : vector<8x96xf32> to vector<1x8x96xf32>
    %152 = arith.truncf %151 : vector<1x8x96xf32> to vector<1x8x96xbf16>
    "tpu.trace_start"() <{level = 10 : i32, message = "bie,bre->bir"}> : () -> ()
    %cst_42 = arith.constant dense<0.000000e+00> : vector<1x8x96xf32>
    %153 = tpu.matmul %152, %143, %cst_42 {dimension_numbers = #tpu.dot_dimension_numbers<[2], [2], [1], [1], [0, 0, 0, 1, 1, 1], [0], [0]>} : vector<1x8x96xbf16>, vector<1x96x96xbf16>, vector<1x8x96xf32> -> vector<1x8x96xf32>
    "tpu.trace_stop"() : () -> ()
    %cst_43 = arith.constant dense<0xFF800000> : vector<1x8xf32>
    %154 = vector.multi_reduction <maximumf>, %153, %cst_43 [2] : vector<1x8x96xf32> to vector<1x8xf32>
    %155 = vector.shape_cast %154 : vector<1x8xf32> to vector<1x8x1xf32>
    %156 = vector.broadcast %155 : vector<1x8x1xf32> to vector<1x8x96xf32>
    %157 = arith.subf %153, %156 : vector<1x8x96xf32>
    %158 = math.exp %157 : vector<1x8x96xf32>
    %159 = arith.truncf %158 : vector<1x8x96xf32> to vector<1x8x96xbf16>
    "tpu.trace_start"() <{level = 10 : i32, message = "bir,bre->bie"}> : () -> ()
    %cst_44 = arith.constant dense<0.000000e+00> : vector<1x8x96xf32>
    %160 = tpu.matmul %159, %150, %cst_44 {dimension_numbers = #tpu.dot_dimension_numbers<[2], [1], [1], [2], [0, 0, 0, 1, 1, 2], [0], [0]>} : vector<1x8x96xbf16>, vector<1x96x96xbf16>, vector<1x8x96xf32> -> vector<1x8x96xf32>
    "tpu.trace_stop"() : () -> ()
    %161 = vector.shape_cast %160 : vector<1x8x96xf32> to vector<8x96xf32>
    %162 = vector.shape_cast %158 : vector<1x8x96xf32> to vector<8x96xf32>
    %163 = arith.truncf %162 : vector<8x96xf32> to vector<8x96xbf16>
    %cst_45 = arith.constant dense<0.000000e+00> : vector<8x96xf32>
    %164 = tpu.matmul %163, %7, %cst_45 {dimension_numbers = #tpu.dot_dimension_numbers<[1], [0], [0], [1], [0, 0, 1, 1], [], []>} : vector<8x96xbf16>, vector<96x96xbf16>, vector<8x96xf32> -> vector<8x96xf32>
    %165 = arith.divf %161, %164 : vector<8x96xf32>
    %166 = arith.truncf %165 : vector<8x96xf32> to vector<8x96xbf16>
    %cst_46 = arith.constant dense<0.000000e+00> : vector<8x96xf32>
    %167 = tpu.matmul %166, %114, %cst_46 {dimension_numbers = #tpu.dot_dimension_numbers<[1], [0], [0], [1], [0, 0, 1, 1], [], []>} : vector<8x96xbf16>, vector<96x96xbf16>, vector<8x96xf32> -> vector<8x96xf32>
    %168 = vector.broadcast %120 : vector<1x96xf32> to vector<8x96xf32>
    %169 = arith.addf %167, %168 : vector<8x96xf32>
    %170 = arith.addf %123, %169 : vector<8x96xf32>
    %cst_47 = arith.constant dense<0.000000e+00> : vector<8xf32>
    %171 = vector.multi_reduction <add>, %170, %cst_47 [1] : vector<8x96xf32> to vector<8xf32>
    %172 = vector.shape_cast %171 : vector<8xf32> to vector<8x1xf32>
    %cst_48 = arith.constant 9.600000e+01 : f32
    %173 = vector.broadcast %cst_48 : f32 to vector<8x1xf32>
    %174 = arith.divf %172, %173 : vector<8x1xf32>
    %175 = vector.broadcast %174 : vector<8x1xf32> to vector<8x96xf32>
    %176 = arith.subf %170, %175 : vector<8x96xf32>
    %177 = arith.mulf %176, %176 : vector<8x96xf32>
    %cst_49 = arith.constant dense<0.000000e+00> : vector<8xf32>
    %178 = vector.multi_reduction <add>, %177, %cst_49 [1] : vector<8x96xf32> to vector<8xf32>
    %179 = vector.shape_cast %178 : vector<8xf32> to vector<8x1xf32>
    %cst_50 = arith.constant 9.600000e+01 : f32
    %180 = vector.broadcast %cst_50 : f32 to vector<8x1xf32>
    %181 = arith.divf %179, %180 : vector<8x1xf32>
    %cst_51 = arith.constant 9.99999974E-6 : f32
    %182 = vector.broadcast %cst_51 : f32 to vector<8x1xf32>
    %183 = arith.addf %181, %182 : vector<8x1xf32>
    %184 = math.rsqrt %183 : vector<8x1xf32>
    %185 = vector.broadcast %184 : vector<8x1xf32> to vector<8x96xf32>
    %186 = arith.mulf %176, %185 : vector<8x96xf32>
    %187 = vector.broadcast %121 : vector<1x96xf32> to vector<8x96xf32>
    %188 = arith.mulf %186, %187 : vector<8x96xf32>
    %189 = vector.broadcast %122 : vector<1x96xf32> to vector<8x96xf32>
    %190 = arith.addf %188, %189 : vector<8x96xf32>
    %191 = arith.addf %190, %5 : vector<8x96xf32>
    %cst_52 = arith.constant dense<0.000000e+00> : vector<8xf32>
    %192 = vector.multi_reduction <add>, %191, %cst_52 [1] : vector<8x96xf32> to vector<8xf32>
    %193 = vector.shape_cast %192 : vector<8xf32> to vector<8x1xf32>
    %cst_53 = arith.constant 9.600000e+01 : f32
    %194 = vector.broadcast %cst_53 : f32 to vector<8x1xf32>
    %195 = arith.divf %193, %194 : vector<8x1xf32>
    %196 = vector.broadcast %195 : vector<8x1xf32> to vector<8x96xf32>
    %197 = arith.subf %191, %196 : vector<8x96xf32>
    %198 = arith.mulf %197, %197 : vector<8x96xf32>
    %cst_54 = arith.constant dense<0.000000e+00> : vector<8xf32>
    %199 = vector.multi_reduction <add>, %198, %cst_54 [1] : vector<8x96xf32> to vector<8xf32>
    %200 = vector.shape_cast %199 : vector<8xf32> to vector<8x1xf32>
    %cst_55 = arith.constant 9.600000e+01 : f32
    %201 = vector.broadcast %cst_55 : f32 to vector<8x1xf32>
    %202 = arith.divf %200, %201 : vector<8x1xf32>
    %cst_56 = arith.constant 9.99999974E-6 : f32
    %203 = vector.broadcast %cst_56 : f32 to vector<8x1xf32>
    %204 = arith.addf %202, %203 : vector<8x1xf32>
    %205 = math.rsqrt %204 : vector<8x1xf32>
    %206 = vector.broadcast %205 : vector<8x1xf32> to vector<8x96xf32>
    %207 = arith.mulf %197, %206 : vector<8x96xf32>
    %208 = vector.broadcast %121 : vector<1x96xf32> to vector<8x96xf32>
    %209 = arith.mulf %207, %208 : vector<8x96xf32>
    %210 = vector.broadcast %122 : vector<1x96xf32> to vector<8x96xf32>
    %211 = arith.addf %209, %210 : vector<8x96xf32>
    %212 = vector.shape_cast %211 : vector<8x96xf32> to vector<1x8x96xf32>
    %c0_57 = arith.constant 0 : index
    %c0_58 = arith.constant 0 : index
    %c0_59 = arith.constant 0 : index
    %213 = vector.load %arg8[%c0_57, %c0_58, %c0_59] : memref<1x8x96xf32, #tpu.memory_space<vmem>>, vector<1x8x96xf32>
    tpu.vector_store %arg8[%c0_57, %c0_58, %c0_59], %212 {strides = array<i32>} : memref<1x8x96xf32, #tpu.memory_space<vmem>>, vector<1x8x96xf32>,
    return
  }
  func.func @transform_0(%arg0: i32, %arg1: i32) -> (i32, i32, i32) {
    %c0_i32 = arith.constant 0 : i32
    %c0_i32_0 = arith.constant 0 : i32
    %c0_i32_1 = arith.constant 0 : i32
    return %arg0, %c0_i32, %c0_i32_0 : i32, i32, i32
  }
  func.func @transform_1(%arg0: i32, %arg1: i32) -> (i32, i32) {
    %c0_i32 = arith.constant 0 : i32
    %c0_i32_0 = arith.constant 0 : i32
    %c0_i32_1 = arith.constant 0 : i32
    return %c0_i32, %c0_i32_0 : i32, i32
  }
  func.func @transform_2(%arg0: i32, %arg1: i32) -> (i32, i32) {
    %c0_i32 = arith.constant 0 : i32
    %c0_i32_0 = arith.constant 0 : i32
    %c0_i32_1 = arith.constant 0 : i32
    return %c0_i32, %c0_i32_0 : i32, i32
  }
  func.func @transform_3(%arg0: i32, %arg1: i32) -> (i32, i32, i32) {
    %c0_i32 = arith.constant 0 : i32
    %c0_i32_0 = arith.constant 0 : i32
    %c0_i32_1 = arith.constant 0 : i32
    return %arg1, %c0_i32, %c0_i32_0 : i32, i32, i32
  }
  func.func @transform_4(%arg0: i32, %arg1: i32) -> (i32, i32, i32) {
    %c0_i32 = arith.constant 0 : i32
    %c0_i32_0 = arith.constant 0 : i32
    %c0_i32_1 = arith.constant 0 : i32
    return %arg1, %c0_i32, %c0_i32_0 : i32, i32, i32
  }
  func.func @transform_5(%arg0: i32, %arg1: i32) -> (i32, i32, i32) {
    %c0_i32 = arith.constant 0 : i32
    %c0_i32_0 = arith.constant 0 : i32
    %c0_i32_1 = arith.constant 0 : i32
    return %arg1, %c0_i32, %c0_i32_0 : i32, i32, i32
  }
  func.func @transform_6(%arg0: i32, %arg1: i32) -> (i32, i32, i32) {
    %c0_i32 = arith.constant 0 : i32
    %c0_i32_0 = arith.constant 0 : i32
    %c0_i32_1 = arith.constant 0 : i32
    return %arg0, %c0_i32, %c0_i32_0 : i32, i32, i32
  }
}

</mosaic_0001>

<llo_original>
// kernel: tpu_custom_call.1
$region0: #{tpu_custom_call.1}
  #allocation0 [shape = 'u32[]', space=smem, size = 0x4, offset = 0x4, fixed_abs, tag = 'smem constant byte address 0x4 - core index']
  #allocation1 [shape = 'u32[144,128]{1,0:T(1,128)}', space=vmem, size = 0x12000, scoped, tag = 'internal scratch']
  %s0 = inlined_call_operand.vmem [shape: f32[2,8,96], index: 0, kind: input, shape index: {}]
  %s1 = inlined_call_operand.vmem [shape: f32[8,96], index: 1, kind: input, shape index: {}]
  %s2 = inlined_call_operand.hbm [shape: f32[96,96], index: 2, kind: input, shape index: {}]
  %s3 = inlined_call_operand.hbm [shape: bf16[2,96,384], index: 3, kind: input, shape index: {}]
  %s4 = inlined_call_operand.hbm [shape: bf16[2,96,96], index: 4, kind: input, shape index: {}]
  %s5 = inlined_call_operand.vmem [shape: f32[2,6,96], index: 5, kind: input, shape index: {}]
  %s6 = inlined_call_operand.hbm [shape: f32[2,8,96], index: 6, kind: output, shape index: {}]
  %s7 = sld [smem:[#allocation0]]
  $region73: #{tpu_custom_call.1} parent=0
    _
  %s9 = ssub.s32 1, %s7
  %s10 = scalar_select 0, %s9, %s7
  $region1: #{tpu_custom_call.1} parent=0
    #allocation2 [shape = 'u8[49152]{0}', space=vmem, size = 0xc000, scoped, tag = 'input window, operand 2, single buffered']
    #allocation3 [shape = 's32[2]{0}', space=sflag, size = 0x8, scoped, tag = 'scoped memory for tpu_custom_call.1']
    #allocation4 [shape = 's32[2]{0}', space=sflag, size = 0x8, scoped, tag = 'scoped memory for tpu_custom_call.1']
    #allocation5 [shape = 'u8[147456]{0}', space=vmem, size = 0x24000, scoped, tag = 'input window, operand 3, single buffered']
    #allocation6 [shape = 's32[1]{0}', space=sflag, size = 0x4, scoped, tag = 'scoped memory for tpu_custom_call.1']
    #allocation7 [shape = 'u8[49152]{0}', space=vmem, size = 0xc000, scoped, tag = 'input window, operand 4, single buffered']
    #allocation8 [shape = 'u8[8192]{0}', space=vmem, size = 0x2000, scoped, tag = 'output window, operand 0']
    %11 = vsyncpa [#allocation3], 0
    %12 = vsyncpa [#allocation6], 0
    %13 = vsyncpa [#allocation4], 0
    %s14 = scalar_lea.sflag [#allocation4], 1
    %15 = vsyncpa %s14, 0
    loop: start=0, step=1, limit=4
    $region2: #{tpu_custom_call.1} parent=1 // loop_pre_header
      _
    $region3: #{tpu_custom_call.1} parent=1 // loop_header
      %s17 = sphi 0, %s21
      %p18 = scmp.ge.s32.totalorder %s17, 4
      %s24 = sphi 0, %s36
      %s25 = sphi 0, %s32
      %s26 = sphi 0, %s24
      %s27 = sphi 0, %s25
      %s28 = sphi 0, %s26
      %s29 = sphi 0, %s27
      %s39 = sphi 0, %s41
      %s42 = sphi 0, %s39
      %s43 = sphi 0, %s42
      %s59 = sphi 0, %s43
      %s63 = sphi 0, %s63
      %s65 = sphi 0, %s63
      %s66 = sphi 0, %s65
      %s80 = sphi 0, %s66
      %s84 = sphi 0, %s84
      %s86 = sphi 0, %s84
      %s87 = sphi 0, %s86
      %s101 = sphi 0, %s87
      %s107 = sphi 0, %s109
      %s110 = sphi 0, %s107
      %s111 = sphi 0, %s110
      %s127 = sphi 0, %s111
      %s133 = sphi 0, %s135
      %s136 = sphi 0, %s133
      %s137 = sphi 0, %s136
      %s153 = sphi 0, %s137
      %s159 = sphi 0, %s161
      %s162 = sphi 0, %s159
      %s163 = sphi 0, %s162
      %s179 = sphi 0, %s163
      %s185 = sphi 0, %s187
      %s188 = sphi 0, %s185
      %s189 = sphi 0, %s188
      %s205 = sphi 0, %s189
    $region4: #{tpu_custom_call.1} parent=1 // loop_header_branch
      %20 = sbr.rel (%p18) target = $region8
    $region5: #{tpu_custom_call.1} parent=1 // loop_body
      %s22 = ssub.s32 %s17, 1
      %s23 = ssub.s32 %s17, 2
      %s30 = sadd.s32 1, %s25
      %p31 = scmp.ge.s32.totalorder %s30, 1
      %s32 = scalar_select %p31, 0, %s30
      %s33 = sadd.s32 1, %s24
      %s34 = scalar_select %p31, %s33, %s24
      %p35 = scmp.ge.s32.totalorder %s34, 2
      %s36 = scalar_select %p35, 0, %s34
      %s37 = ssub.s32 %s24, %s36
      %p38 = scmp.eq.s32.totalorder %s37, 0
      %s40 = sadd.s32 %s39, 1
      %s41 = scalar_select %p38, %s39, %s40
      %p44 = pneg %p38
      %p45 = scmp.eq.s32.totalorder %s17, 1
      %p46 = por %p44, %p45
      %p47 = scmp.ne.s32.totalorder %s39, %s42
      %p48 = scmp.eq.s32.totalorder %s17, 0
      %p49 = por %p47, %p48
      %p50 = scmp.ne.s32.totalorder %s39, %s42
      %p51 = scmp.eq.s32.totalorder %s22, 1
      %p52 = por %p50, %p51
      %p53 = scmp.ne.s32.totalorder %s42, %s43
      %p54 = scmp.eq.s32.totalorder %s22, 0
      %p55 = por %p53, %p54
      %p56 = scmp.ne.s32.totalorder %s42, %s43
      %p57 = scmp.eq.s32.totalorder %s23, 1
      %p58 = por %p56, %p57
      %p60 = scmp.ne.s32.totalorder %s43, %s59
      %p61 = scmp.eq.s32.totalorder %s23, 0
      %p62 = por %p60, %p61
      %s64 = sadd.s32 %s63, 1
      %p67 = scmp.eq.s32.totalorder %s17, 1
      %p68 = scmp.ne.s32.totalorder %s63, %s65
      %p69 = scmp.eq.s32.totalorder %s17, 0
      %p70 = por %p68, %p69
      %p71 = scmp.ne.s32.totalorder %s63, %s65
      %p72 = scmp.eq.s32.totalorder %s22, 1
      %p73 = por %p71, %p72
      %p74 = scmp.ne.s32.totalorder %s65, %s66
      %p75 = scmp.eq.s32.totalorder %s22, 0
      %p76 = por %p74, %p75
      %p77 = scmp.ne.s32.totalorder %s65, %s66
      %p78 = scmp.eq.s32.totalorder %s23, 1
      %p79 = por %p77, %p78
      %p81 = scmp.ne.s32.totalorder %s66, %s80
      %p82 = scmp.eq.s32.totalorder %s23, 0
      %p83 = por %p81, %p82
      %s85 = sadd.s32 %s84, 1
      %p88 = scmp.eq.s32.totalorder %s17, 1
      %p89 = scmp.ne.s32.totalorder %s84, %s86
      %p90 = scmp.eq.s32.totalorder %s17, 0
      %p91 = por %p89, %p90
      %p92 = scmp.ne.s32.totalorder %s84, %s86
      %p93 = scmp.eq.s32.totalorder %s22, 1
      %p94 = por %p92, %p93
      %p95 = scmp.ne.s32.totalorder %s86, %s87
      %p96 = scmp.eq.s32.totalorder %s22, 0
      %p97 = por %p95, %p96
      %p98 = scmp.ne.s32.totalorder %s86, %s87
      %p99 = scmp.eq.s32.totalorder %s23, 1
      %p100 = por %p98, %p99
      %p102 = scmp.ne.s32.totalorder %s87, %s101
      %p103 = scmp.eq.s32.totalorder %s23, 0
      %p104 = por %p102, %p103
      %s105 = ssub.s32 %s25, %s32
      %p106 = scmp.eq.s32.totalorder %s105, 0
      %s108 = sadd.s32 %s107, 1
      %s109 = scalar_select %p106, %s107, %s108
      %p112 = pneg %p106
      %p113 = scmp.eq.s32.totalorder %s17, 1
      %p114 = por %p112, %p113
      %p115 = scmp.ne.s32.totalorder %s107, %s110
      %p116 = scmp.eq.s32.totalorder %s17, 0
      %p117 = por %p115, %p116
      %p118 = scmp.ne.s32.totalorder %s107, %s110
      %p119 = scmp.eq.s32.totalorder %s22, 1
      %p120 = por %p118, %p119
      %p121 = scmp.ne.s32.totalorder %s110, %s111
      %p122 = scmp.eq.s32.totalorder %s22, 0
      %p123 = por %p121, %p122
      %p124 = scmp.ne.s32.totalorder %s110, %s111
      %p125 = scmp.eq.s32.totalorder %s23, 1
      %p126 = por %p124, %p125
      %p128 = scmp.ne.s32.totalorder %s111, %s127
      %p129 = scmp.eq.s32.totalorder %s23, 0
      %p130 = por %p128, %p129
      %s131 = ssub.s32 %s25, %s32
      %p132 = scmp.eq.s32.totalorder %s131, 0
      %s134 = sadd.s32 %s133, 1
      %s135 = scalar_select %p132, %s133, %s134
      %p138 = pneg %p132
      %p139 = scmp.eq.s32.totalorder %s17, 1
      %p140 = por %p138, %p139
      %p141 = scmp.ne.s32.totalorder %s133, %s136
      %p142 = scmp.eq.s32.totalorder %s17, 0
      %p143 = por %p141, %p142
      %p144 = scmp.ne.s32.totalorder %s133, %s136
      %p145 = scmp.eq.s32.totalorder %s22, 1
      %p146 = por %p144, %p145
      %p147 = scmp.ne.s32.totalorder %s136, %s137
      %p148 = scmp.eq.s32.totalorder %s22, 0
      %p149 = por %p147, %p148
      %p150 = scmp.ne.s32.totalorder %s136, %s137
      %p151 = scmp.eq.s32.totalorder %s23, 1
      %p152 = por %p150, %p151
      %p154 = scmp.ne.s32.totalorder %s137, %s153
      %p155 = scmp.eq.s32.totalorder %s23, 0
      %p156 = por %p154, %p155
      %s157 = ssub.s32 %s25, %s32
      %p158 = scmp.eq.s32.totalorder %s157, 0
      %s160 = sadd.s32 %s159, 1
      %s161 = scalar_select %p158, %s159, %s160
      %p164 = pneg %p158
      %p165 = scmp.eq.s32.totalorder %s17, 1
      %p166 = por %p164, %p165
      %p167 = scmp.ne.s32.totalorder %s159, %s162
      %p168 = scmp.eq.s32.totalorder %s17, 0
      %p169 = por %p167, %p168
      %p170 = scmp.ne.s32.totalorder %s159, %s162
      %p171 = scmp.eq.s32.totalorder %s22, 1
      %p172 = por %p170, %p171
      %p173 = scmp.ne.s32.totalorder %s162, %s163
      %p174 = scmp.eq.s32.totalorder %s22, 0
      %p175 = por %p173, %p174
      %p176 = scmp.ne.s32.totalorder %s162, %s163
      %p177 = scmp.eq.s32.totalorder %s23, 1
      %p178 = por %p176, %p177
      %p180 = scmp.ne.s32.totalorder %s163, %s179
      %p181 = scmp.eq.s32.totalorder %s23, 0
      %p182 = por %p180, %p181
      %s183 = ssub.s32 %s24, %s36
      %p184 = scmp.eq.s32.totalorder %s183, 0
      %s186 = sadd.s32 %s185, 1
      %s187 = scalar_select %p184, %s185, %s186
      %p190 = pneg %p184
      %p191 = scmp.eq.s32.totalorder %s17, 1
      %p192 = por %p190, %p191
      %p193 = scmp.ne.s32.totalorder %s185, %s188
      %p194 = scmp.eq.s32.totalorder %s17, 0
      %p195 = por %p193, %p194
      %p196 = scmp.ne.s32.totalorder %s185, %s188
      %p197 = scmp.eq.s32.totalorder %s22, 1
      %p198 = por %p196, %p197
      %p199 = scmp.ne.s32.totalorder %s188, %s189
      %p200 = scmp.eq.s32.totalorder %s22, 0
      %p201 = por %p199, %p200
      %p202 = scmp.ne.s32.totalorder %s188, %s189
      %p203 = scmp.eq.s32.totalorder %s23, 1
      %p204 = por %p202, %p203
      %p206 = scmp.ne.s32.totalorder %s189, %s205
      %p207 = scmp.eq.s32.totalorder %s23, 0
      %p208 = por %p206, %p207
      %p209 = scmp.le.s32.totalorder 1, %s17
      %p210 = scmp.lt.s32.totalorder %s17, 3
      %p211 = pnand %p209, %p210
      %p212 = pneg %p211
      // Predicated region
      $region9: #{tpu_custom_call.1} parent=5 // pred_check
        _
      $region10: #{tpu_custom_call.1} parent=5 // pred_check_branch
        %214 = sbr.rel (%p211) target = $region12
      $region11: #{tpu_custom_call.1} parent=5 // pred_region
        %s215 = ssub.s32 %s17, 1
        // Predicated region
        $region13: #{tpu_custom_call.1} parent=11 // pred_check
          %p216 = pneg %p76
        $region14: #{tpu_custom_call.1} parent=11 // pred_check_branch
          %218 = sbr.rel (%p216) target = $region16
        $region15: #{tpu_custom_call.1} parent=11 // pred_region
          _
        $region16: #{tpu_custom_call.1} parent=11 // pred_fallthru
          _
        // Predicated region
        $region17: #{tpu_custom_call.1} parent=11 // pred_check
          %p219 = pneg %p97
        $region18: #{tpu_custom_call.1} parent=11 // pred_check_branch
          %221 = sbr.rel (%p219) target = $region20
        $region19: #{tpu_custom_call.1} parent=11 // pred_region
          %s223 = ssub.s32 1536, 1536
          %224 = vsyncadd [#allocation3], %s223
          %s225 = sshll.u32 [#allocation2], 4
          %s226 = int_to_ptr.vmem [resolvable:$true] %s225
          %231 = dma.hbm_to_vmem [thread:$0]  %s2, 1536, %s226, [#allocation3], 128, 128, 8
        $region20: #{tpu_custom_call.1} parent=11 // pred_fallthru
          _
        // Predicated region
        $region21: #{tpu_custom_call.1} parent=11 // pred_check
          %p232 = pneg %p123
        $region22: #{tpu_custom_call.1} parent=11 // pred_check_branch
          %234 = sbr.rel (%p232) target = $region24
        $region23: #{tpu_custom_call.1} parent=11 // pred_region
          %s235 = smul.u32 2, %s27
          %s237 = ssub.s32 4608, 4608
          %238 = vsyncadd [#allocation6], %s237
          %s239 = smul.addr %s235, 36
          %s240 = smul.addr %s239, 64
          %s241 = scalar_lea.hbm %s3, %s240
          %s242 = sshll.u32 [#allocation5], 4
          %s243 = int_to_ptr.vmem [resolvable:$true] %s242
          %248 = dma.hbm_to_vmem [thread:$0]  %s241, 4608, %s243, [#allocation6], 192, 192, 12
        $region24: #{tpu_custom_call.1} parent=11 // pred_fallthru
          _
        // Predicated region
        $region25: #{tpu_custom_call.1} parent=11 // pred_check
          %p249 = pneg %p149
        $region26: #{tpu_custom_call.1} parent=11 // pred_check_branch
          %251 = sbr.rel (%p249) target = $region28
        $region27: #{tpu_custom_call.1} parent=11 // pred_region
          %s252 = smul.u32 2, %s27
          %s254 = ssub.s32 1536, 1536
          %255 = vsyncadd [#allocation6], %s254
          %s256 = smul.addr %s252, 12
          %s257 = smul.addr %s256, 64
          %s258 = scalar_lea.hbm %s4, %s257
          %s259 = sshll.u32 [#allocation7], 4
          %s260 = int_to_ptr.vmem [resolvable:$true] %s259
          %265 = dma.hbm_to_vmem [thread:$0]  %s258, 1536, %s260, [#allocation6], 64, 64, 4
        $region28: #{tpu_custom_call.1} parent=11 // pred_fallthru
          _
        // Predicated region
        $region29: #{tpu_custom_call.1} parent=11 // pred_check
          %p266 = pneg %p175
        $region30: #{tpu_custom_call.1} parent=11 // pred_check_branch
          %268 = sbr.rel (%p266) target = $region32
        $region31: #{tpu_custom_call.1} parent=11 // pred_region
          %s269 = smul.u32 2, %s27
          %p270 = scmp.lt.s32.totalorder %s269, 1
          %s271 = scalar_select %p270, %s269, 1
          %s272 = smul.addr %s271, 8
          %s273 = scalar_lea.vmem %s5, %s272
          %s274 = smul.u32 2, %s27
        $region32: #{tpu_custom_call.1} parent=11 // pred_fallthru
          _
      $region12: #{tpu_custom_call.1} parent=5 // pred_fallthru
        _
      %p275 = scmp.lt.s32.totalorder %s17, 2
      // Predicated region
      $region33: #{tpu_custom_call.1} parent=5 // pred_check
        %p276 = pneg %p275
      $region34: #{tpu_custom_call.1} parent=5 // pred_check_branch
        %278 = sbr.rel (%p276) target = $region36
      $region35: #{tpu_custom_call.1} parent=5 // pred_region
        // Predicated region
        $region37: #{tpu_custom_call.1} parent=35 // pred_check
          %p279 = pneg %p49
        $region38: #{tpu_custom_call.1} parent=35 // pred_check_branch
          %281 = sbr.rel (%p279) target = $region40
        $region39: #{tpu_custom_call.1} parent=35 // pred_region
          %p282 = scmp.lt.s32.totalorder %s24, 1
          %s283 = scalar_select %p282, %s24, 1
          %s284 = smul.addr %s283, 8
          %s285 = scalar_lea.vmem %s0, %s284
        $region40: #{tpu_custom_call.1} parent=35 // pred_fallthru
          _
      $region36: #{tpu_custom_call.1} parent=5 // pred_fallthru
        _
      %p286 = scmp.le.s32.totalorder 1, %s17
      %p287 = scmp.lt.s32.totalorder %s17, 3
      %p288 = pnand %p286, %p287
      %p289 = pneg %p288
      // Predicated region
      $region41: #{tpu_custom_call.1} parent=5 // pred_check
        _
      $region42: #{tpu_custom_call.1} parent=5 // pred_check_branch
        %291 = sbr.rel (%p288) target = $region44
      $region43: #{tpu_custom_call.1} parent=5 // pred_region
        %s292 = ssub.s32 %s17, 1
        // Predicated region
        $region45: #{tpu_custom_call.1} parent=43 // pred_check
          %p293 = pneg %p97
        $region46: #{tpu_custom_call.1} parent=43 // pred_check_branch
          %295 = sbr.rel (%p293) target = $region48
        $region47: #{tpu_custom_call.1} parent=43 // pred_region
          %296 = dma.done [#allocation3], 1536
        $region48: #{tpu_custom_call.1} parent=43 // pred_fallthru
          _
        // Predicated region
        $region49: #{tpu_custom_call.1} parent=43 // pred_check
          %p297 = pneg %p123
        $region50: #{tpu_custom_call.1} parent=43 // pred_check_branch
          %299 = sbr.rel (%p297) target = $region52
        $region51: #{tpu_custom_call.1} parent=43 // pred_region
          %300 = dma.done [#allocation6], 4608
        $region52: #{tpu_custom_call.1} parent=43 // pred_fallthru
          _
        // Predicated region
        $region53: #{tpu_custom_call.1} parent=43 // pred_check
          %p301 = pneg %p149
        $region54: #{tpu_custom_call.1} parent=43 // pred_check_branch
          %303 = sbr.rel (%p301) target = $region56
        $region55: #{tpu_custom_call.1} parent=43 // pred_region
          %304 = dma.done [#allocation6], 1536
        $region56: #{tpu_custom_call.1} parent=43 // pred_fallthru
          _
        %p305 = scmp.lt.s32.totalorder %s26, 1
        %s306 = scalar_select %p305, %s26, 1
        %s307 = smul.addr %s306, 8
        %s308 = scalar_lea.vmem %s0, %s307
        %p309 = pneg %p55
        %p310 = pneg %p52
        %p311 = pneg %p76
        %p312 = pneg %p73
        %p313 = pneg %p97
        %p314 = pneg %p94
        %p315 = pneg %p123
        %p316 = pneg %p120
        %p317 = pneg %p149
        %p318 = pneg %p146
        %s319 = smul.u32 2, %s27
        %p320 = scmp.lt.s32.totalorder %s319, 1
        %s321 = scalar_select %p320, %s319, 1
        %s322 = smul.addr %s321, 8
        %s323 = scalar_lea.vmem %s5, %s322
        %p324 = pneg %p175
        %p325 = pneg %p172
        %p326 = pneg %p201
        %p327 = pneg %p198
        %s328 = sand.u32 %s188, 1
        %s329 = scalar_lea.sflag [#allocation4], %s328
        %s330 = sand.u32 %s188, 1
        %s331 = smul.addr %s330, 8
        %s332 = scalar_lea.vmem [#allocation8], %s331
        %p333 = scmp.lt.s32.totalorder %s26, 1
        %s334 = scalar_select %p333, %s26, 1
        %s335 = smul.addr %s334, 8
        %s336 = scalar_lea.vmem %s0, %s335
        %s337 = smul.u32 2, %s27
        %s338 = smul.u32 2, %s27
        %s339 = smul.u32 2, %s27
        %p340 = scmp.lt.s32.totalorder %s339, 1
        %s341 = scalar_select %p340, %s339, 1
        %s342 = smul.addr %s341, 8
        %s343 = scalar_lea.vmem %s5, %s342
        %s344 = smul.u32 2, %s27
        %p346 = scmp.eq.s32.totalorder %s27, 0
        // Predicated region
        $region57: #{tpu_custom_call.1} parent=43 // pred_check
          %p347 = pneg %p346
        $region58: #{tpu_custom_call.1} parent=43 // pred_check_branch
          %349 = sbr.rel (%p347) target = $region60
        $region59: #{tpu_custom_call.1} parent=43 // pred_region
          %v350 = vld [vmem:[%s336] sm:$0xff]
          %vm351 = vcmask 785408
          %352 = vst.msk [vmem:[%s332] sm:$0xff] %vm351, %v350
        $region60: #{tpu_custom_call.1} parent=43 // pred_fallthru
          _
        %v353 = vld [vmem:[%s1] sm:$0xff]
        %v354 = vld [vmem:[#allocation2] sm:$0xff]
        %v355 = vld [vmem:[#allocation2 + $0x8] sm:$0xff]
        %v356 = vld [vmem:[#allocation2 + $0x10] sm:$0xff]
        %v357 = vld [vmem:[#allocation2 + $0x18] sm:$0xff]
        %v358 = vld [vmem:[#allocation2 + $0x20] sm:$0xff]
        %v359 = vld [vmem:[#allocation2 + $0x28] sm:$0xff]
        %v360 = vld [vmem:[#allocation2 + $0x30] sm:$0xff]
        %v361 = vld [vmem:[#allocation2 + $0x38] sm:$0xff]
        %v362 = vld [vmem:[#allocation2 + $0x40] sm:$0xff]
        %v363 = vld [vmem:[#allocation2 + $0x48] sm:$0xff]
        %v364 = vld [vmem:[#allocation2 + $0x50] sm:$0xff]
        %v365 = vld [vmem:[#allocation2 + $0x58] sm:$0xff]
        %v366 = vpack.c.bf16 %v355, %v354
        %v367 = vpack.c.bf16 %v357, %v356
        %v368 = vpack.c.bf16 %v359, %v358
        %v369 = vpack.c.bf16 %v361, %v360
        %v370 = vpack.c.bf16 %v363, %v362
        %v371 = vpack.c.bf16 %v365, %v364
        %v372 = vld [vmem:[%s332] sm:$0xff]
        %v373 = vld [vmem:[#allocation5] sm:$0xff]
        %v374 = vld [vmem:[#allocation5 + $0x8] sm:$0xf]
        %v375 = vld [vmem:[#allocation5 + $0xc] sm:$0xff]
        %v376 = vld [vmem:[#allocation5 + $0x14] sm:$0xf]
        %v377 = vld [vmem:[#allocation5 + $0x18] sm:$0xff]
        %v378 = vld [vmem:[#allocation5 + $0x20] sm:$0xf]
        %v379 = vld [vmem:[#allocation5 + $0x24] sm:$0xff]
        %v380 = vld [vmem:[#allocation5 + $0x2c] sm:$0xf]
        %v381 = vld [vmem:[#allocation5 + $0x30] sm:$0xff]
        %v382 = vld [vmem:[#allocation5 + $0x38] sm:$0xf]
        %v383 = vld [vmem:[#allocation5 + $0x3c] sm:$0xff]
        %v384 = vld [vmem:[#allocation5 + $0x44] sm:$0xf]
        %v385 = vld [vmem:[#allocation5 + $0x48] sm:$0xff]
        %v386 = vld [vmem:[#allocation5 + $0x50] sm:$0xf]
        %v387 = vld [vmem:[#allocation5 + $0x54] sm:$0xff]
        %v388 = vld [vmem:[#allocation5 + $0x5c] sm:$0xf]
        %v389 = vld [vmem:[#allocation5 + $0x60] sm:$0xff]
        %v390 = vld [vmem:[#allocation5 + $0x68] sm:$0xf]
        %v391 = vld [vmem:[#allocation5 + $0x6c] sm:$0xff]
        %v392 = vld [vmem:[#allocation5 + $0x74] sm:$0xf]
        %v393 = vld [vmem:[#allocation5 + $0x78] sm:$0xff]
        %v394 = vld [vmem:[#allocation5 + $0x80] sm:$0xf]
        %v395 = vld [vmem:[#allocation5 + $0x84] sm:$0xff]
        %v396 = vld [vmem:[#allocation5 + $0x8c] sm:$0xf]
        %v397 = vld [vmem:[#allocation7] sm:$0xf]
        %v398 = vld [vmem:[#allocation7 + $0x4] sm:$0xf]
        %v399 = vld [vmem:[#allocation7 + $0x8] sm:$0xf]
        %v400 = vld [vmem:[#allocation7 + $0xc] sm:$0xf]
        %v401 = vld [vmem:[#allocation7 + $0x10] sm:$0xf]
        %v402 = vld [vmem:[#allocation7 + $0x14] sm:$0xf]
        %v403 = vld [vmem:[#allocation7 + $0x18] sm:$0xf]
        %v404 = vld [vmem:[#allocation7 + $0x1c] sm:$0xf]
        %v405 = vld [vmem:[#allocation7 + $0x20] sm:$0xf]
        %v406 = vld [vmem:[#allocation7 + $0x24] sm:$0xf]
        %v407 = vld [vmem:[#allocation7 + $0x28] sm:$0xf]
        %v408 = vld [vmem:[#allocation7 + $0x2c] sm:$0xf]
        %v409 = vld [vmem:[%s343] sm:$0x3f]
        %v410 = vadd.f32 %v372, %v353
        %v411 = vpack.c.bf16 %v410, %v410
        %v436 = vunpack.c.l.b16 %v373
        %v437 = vunpack.c.h.b16 %v373
        %v438 = vunpack.c.l.b16 %v374
        %v439 = vunpack.c.l.b16 %v375
        %v440 = vunpack.c.h.b16 %v375
        %v441 = vunpack.c.l.b16 %v376
        %v442 = vunpack.c.l.b16 %v377
        %v443 = vunpack.c.h.b16 %v377
        %v444 = vunpack.c.l.b16 %v378
        %v445 = vunpack.c.l.b16 %v379
        %v446 = vunpack.c.h.b16 %v379
        %v447 = vunpack.c.l.b16 %v380
        %v448 = vunpack.c.l.b16 %v381
        %v449 = vunpack.c.h.b16 %v381
        %v450 = vunpack.c.l.b16 %v382
        %v451 = vunpack.c.l.b16 %v383
        %v452 = vunpack.c.h.b16 %v383
        %v453 = vunpack.c.l.b16 %v384
        %v454 = vunpack.c.l.b16 %v385
        %v455 = vunpack.c.h.b16 %v385
        %v456 = vunpack.c.l.b16 %v386
        %v457 = vunpack.c.l.b16 %v387
        %v458 = vunpack.c.h.b16 %v387
        %v459 = vunpack.c.l.b16 %v388
        %v460 = vunpack.c.l.b16 %v389
        %v461 = vunpack.c.h.b16 %v389
        %v462 = vunpack.c.l.b16 %v390
        %v463 = vunpack.c.l.b16 %v391
        %v464 = vunpack.c.h.b16 %v391
        %v465 = vunpack.c.l.b16 %v392
        %v466 = vunpack.c.l.b16 %v393
        %v467 = vunpack.c.h.b16 %v393
        %v468 = vunpack.c.l.b16 %v394
        %v469 = vunpack.c.l.b16 %v395
        %v470 = vunpack.c.h.b16 %v395
        %v471 = vunpack.c.l.b16 %v396
        %v472 = vpack.c.b16 %v439, %v436
        %v473 = vpack.c.b16 %v440, %v437
        %v474 = vpack.c.b16 %v441, %v438
        %v475 = vpack.c.b16 %v445, %v442
        %v476 = vpack.c.b16 %v446, %v443
        %v477 = vpack.c.b16 %v447, %v444
        %v478 = vpack.c.b16 %v451, %v448
        %v479 = vpack.c.b16 %v452, %v449
        %v480 = vpack.c.b16 %v453, %v450
        %v481 = vpack.c.b16 %v457, %v454
        %v482 = vpack.c.b16 %v458, %v455
        %v483 = vpack.c.b16 %v459, %v456
        %v484 = vpack.c.b16 %v463, %v460
        %v485 = vpack.c.b16 %v464, %v461
        %v486 = vpack.c.b16 %v465, %v462
        %v487 = vpack.c.b16 %v469, %v466
        %v488 = vpack.c.b16 %v470, %v467
        %v489 = vpack.c.b16 %v471, %v468
        %vm508 = vcmask 785408
        %v510 = vsel %vm508, %v411, 0
        %512 = vmatprep.subr.bf16.mxu0 %v473
        %513 = vmatpush1.bf16.msra.mxu0 %v472
        %514 = vmatprep.subr.bf16.mxu0 %v476
        %515 = vmatpush1.bf16.msra.mxu0 %v475
        %516 = vmatprep.subr.bf16.mxu0 %v479
        %517 = vmatpush1.bf16.msra.mxu0 %v478
        %518 = vmatprep.subr.bf16.mxu0 %v482
        %519 = vmatpush1.bf16.msra.mxu0 %v481
        %520 = vmatprep.subr.bf16.mxu0 %v485
        %521 = vmatpush1.bf16.msra.mxu0 %v484
        %522 = vmatprep.subr.bf16.mxu0 %v488
        %523 = vmatpush1.bf16.msra.mxu0 %v487
        %524 = vmatprep.subr.bf16.mxu0 0
        %525 = vmatpush1.bf16.msra.mxu0 0
        %526 = vmatprep.subr.bf16.mxu0 0
        %527 = vmatpush1.bf16.msra.mxu0 0
        %528 = vmatprep.subr.bf16.mxu0 0
        %529 = vmatpush1.bf16.msra.mxu0 0
        %530 = vmatprep.subr.bf16.mxu0 0
        %531 = vmatpush1.bf16.msra.mxu0 0
        %532 = vmatprep.subr.bf16.mxu0 0
        %533 = vmatpush1.bf16.msra.mxu0 0
        %534 = vmatprep.subr.bf16.mxu0 0
        %535 = vmatpush1.bf16.msra.mxu0 0
        %536 = vmatprep.subr.bf16.mxu0 0
        %537 = vmatpush1.bf16.msra.mxu0 0
        %538 = vmatprep.subr.bf16.mxu0 0
        %539 = vmatpush1.bf16.msra.mxu0 0
        %540 = vmatprep.subr.bf16.mxu0 0
        %541 = vmatpush1.bf16.msra.mxu0 0
        %542 = vmatprep.subr.bf16.mxu0 0
        %543 = vmatpush1.bf16.msra.mxu0 0
        %544 = vmatprep.mubr.bf16.mxu0 0
        %545 = vmatmul.mubr.bf16.gmra.mrb[0].mxu0 %v510
        %v546 = vpop.f32.mrb[0].mxu0
        %v547 = vadd.f32 0.0, %v546
        %v548 = vpop.f32.mrb[0].mxu0
        %v549 = vadd.f32 0.0, %v548
        %v550 = vpop.f32.mrb[0].mxu0
        %v551 = vpop.f32.mrb[0].mxu0
        %552 = vdwg.mxu0
        %553 = vmatprep.subr.bf16.mxu0 0
        %554 = vmatpush1.bf16.msra.mxu0 %v474
        %555 = vmatprep.subr.bf16.mxu0 0
        %556 = vmatpush1.bf16.msra.mxu0 %v477
        %557 = vmatprep.subr.bf16.mxu0 0
        %558 = vmatpush1.bf16.msra.mxu0 %v480
        %559 = vmatprep.subr.bf16.mxu0 0
        %560 = vmatpush1.bf16.msra.mxu0 %v483
        %561 = vmatprep.subr.bf16.mxu0 0
        %562 = vmatpush1.bf16.msra.mxu0 %v486
        %563 = vmatprep.subr.bf16.mxu0 0
        %564 = vmatpush1.bf16.msra.mxu0 %v489
        %565 = vmatprep.subr.bf16.mxu0 0
        %566 = vmatpush1.bf16.msra.mxu0 0
        %567 = vmatprep.subr.bf16.mxu0 0
        %568 = vmatpush1.bf16.msra.mxu0 0
        %569 = vmatprep.subr.bf16.mxu0 0
        %570 = vmatpush1.bf16.msra.mxu0 0
        %571 = vmatprep.subr.bf16.mxu0 0
        %572 = vmatpush1.bf16.msra.mxu0 0
        %573 = vmatprep.subr.bf16.mxu0 0
        %574 = vmatpush1.bf16.msra.mxu0 0
        %575 = vmatprep.subr.bf16.mxu0 0
        %576 = vmatpush1.bf16.msra.mxu0 0
        %577 = vmatprep.subr.bf16.mxu0 0
        %578 = vmatpush1.bf16.msra.mxu0 0
        %579 = vmatprep.subr.bf16.mxu0 0
        %580 = vmatpush1.bf16.msra.mxu0 0
        %581 = vmatprep.subr.bf16.mxu0 0
        %582 = vmatpush1.bf16.msra.mxu0 0
        %583 = vmatprep.subr.bf16.mxu0 0
        %584 = vmatpush1.bf16.msra.mxu0 0
        %585 = vmatprep.mubr.bf16.mxu0 0
        %586 = vmatmul.mubr.bf16.gmra.mrb[0].mxu0 %v510
        %v587 = vpop.f32.mrb[0].mxu0
        %v588 = vadd.f32 0.0, %v587
        %v589 = vpop.f32.mrb[0].mxu0
        %v590 = vpop.f32.mrb[0].mxu0
        %v591 = vpop.f32.mrb[0].mxu0
        %592 = vdwg.mxu0
        %v593 = vlaneseq
        %v594 = vshrl.u32 %v593, 7
        %v595 = vsub.s32 0, %v594
        %v596 = vrot.slane %v409, %v595
        %v597 = vadd.f32 %v547, %v596
        %v598 = vmul.f32 %v597, 0.35355338
        %v599 = vlaneseq
        %v600 = vshrl.u32 %v599, 7
        %v601 = vsub.s32 1, %v600
        %v602 = vrot.slane %v409, %v601
        %v603 = vadd.f32 %v549, %v602
        %v604 = vlaneseq
        %v605 = vshrl.u32 %v604, 7
        %v606 = vsub.s32 2, %v605
        %v607 = vrot.slane %v409, %v606
        %v608 = vadd.f32 %v588, %v607
        %v609 = vmul.f32 %v603, %v354
        %v610 = vmul.f32 %v603, %v355
        %v611 = vmul.f32 %v603, %v356
        %v612 = vmul.f32 %v603, %v357
        %v613 = vmul.f32 %v603, %v358
        %v614 = vmul.f32 %v603, %v359
        %v615 = vmul.f32 %v603, %v360
        %v616 = vmul.f32 %v603, %v361
        %v617 = vmul.f32 %v603, %v362
        %v618 = vmul.f32 %v603, %v363
        %v619 = vmul.f32 %v603, %v364
        %v620 = vmul.f32 %v603, %v365
        %v621 = vpack.c.bf16 %v610, %v609
        %v622 = vpack.c.bf16 %v612, %v611
        %v623 = vpack.c.bf16 %v614, %v613
        %v624 = vpack.c.bf16 %v616, %v615
        %v625 = vpack.c.bf16 %v618, %v617
        %v626 = vpack.c.bf16 %v620, %v619
        %v627 = vmul.f32 %v608, %v354
        %v628 = vmul.f32 %v608, %v355
        %v629 = vmul.f32 %v608, %v356
        %v630 = vmul.f32 %v608, %v357
        %v631 = vmul.f32 %v608, %v358
        %v632 = vmul.f32 %v608, %v359
        %v633 = vmul.f32 %v608, %v360
        %v634 = vmul.f32 %v608, %v361
        %v635 = vmul.f32 %v608, %v362
        %v636 = vmul.f32 %v608, %v363
        %v637 = vmul.f32 %v608, %v364
        %v638 = vmul.f32 %v608, %v365
        %v639 = vpack.c.bf16 %v628, %v627
        %v640 = vpack.c.bf16 %v630, %v629
        %v641 = vpack.c.bf16 %v632, %v631
        %v642 = vpack.c.bf16 %v634, %v633
        %v643 = vpack.c.bf16 %v636, %v635
        %v644 = vpack.c.bf16 %v638, %v637
        %v645 = vpack.c.bf16 %v598, %v598
        %v647 = vsel %vm508, %v645, 0
        %v650 = vsel %vm508, %v621, 0
        %v653 = vsel %vm508, %v622, 0
        %v656 = vsel %vm508, %v623, 0
        %v659 = vsel %vm508, %v624, 0
        %v662 = vsel %vm508, %v625, 0
        %v665 = vsel %vm508, %v626, 0
        %667 = vmatprep.subr.bf16.mxu0 0
        %668 = vmatpush1.bf16.xpose.msra.mxu0 %v650
        %669 = vmatprep.subr.bf16.mxu0 0
        %670 = vmatpush1.bf16.xpose.msra.mxu0 %v653
        %671 = vmatprep.subr.bf16.mxu0 0
        %672 = vmatpush1.bf16.xpose.msra.mxu0 %v656
        %673 = vmatprep.subr.bf16.mxu0 0
        %674 = vmatpush1.bf16.xpose.msra.mxu0 %v659
        %675 = vmatprep.subr.bf16.mxu0 0
        %676 = vmatpush1.bf16.xpose.msra.mxu0 %v662
        %677 = vmatprep.subr.bf16.mxu0 0
        %678 = vmatpush1.bf16.xpose.msra.mxu0 %v665
        %679 = vmatprep.subr.bf16.mxu0 0
        %680 = vmatpush1.bf16.xpose.msra.mxu0 0
        %681 = vmatprep.subr.bf16.mxu0 0
        %682 = vmatpush1.bf16.xpose.msra.mxu0 0
        %683 = vmatprep.subr.bf16.mxu0 0
        %684 = vmatpush1.bf16.xpose.msra.mxu0 0
        %685 = vmatprep.subr.bf16.mxu0 0
        %686 = vmatpush1.bf16.xpose.msra.mxu0 0
        %687 = vmatprep.subr.bf16.mxu0 0
        %688 = vmatpush1.bf16.xpose.msra.mxu0 0
        %689 = vmatprep.subr.bf16.mxu0 0
        %690 = vmatpush1.bf16.xpose.msra.mxu0 0
        %691 = vmatprep.subr.bf16.mxu0 0
        %692 = vmatpush1.bf16.xpose.msra.mxu0 0
        %693 = vmatprep.subr.bf16.mxu0 0
        %694 = vmatpush1.bf16.xpose.msra.mxu0 0
        %695 = vmatprep.subr.bf16.mxu0 0
        %696 = vmatpush1.bf16.xpose.msra.mxu0 0
        %697 = vmatprep.subr.bf16.mxu0 0
        %698 = vmatpush1.bf16.xpose.msra.mxu0 0
        %699 = vmatprep.mubr.bf16.mxu0 0
        %700 = vmatmul.mubr.bf16.gmra.mrb[0].mxu0 %v647
        %v701 = vpop.f32.mrb[0].mxu0
        %v702 = vadd.f32 0.0, %v701
        %v703 = vpop.f32.mrb[0].mxu0
        %v704 = vpop.f32.mrb[0].mxu0
        %v705 = vpop.f32.mrb[0].mxu0
        %706 = vdwg.mxu0
        %v707 = vsel %vm508, %v702, -inf
        %708 = vmax.xlane.f32.xlu0 %v707
        %v709 = vpop.xlane.xlu0 %708
        %v710 = vsub.f32 %v702, %v709
        %v711 = vmul.f32 %v710, 1.442695
        %v712 = vpow.pop %v711
        %v713 = vpack.c.bf16 %v712, %v712
        %v715 = vsel %vm508, %v713, 0
        %717 = vmatprep.subr.bf16.mxu0 0
        %718 = vmatpush1.bf16.msra.mxu0 %v639
        %719 = vmatprep.subr.bf16.mxu0 0
        %720 = vmatpush1.bf16.msra.mxu0 %v640
        %721 = vmatprep.subr.bf16.mxu0 0
        %722 = vmatpush1.bf16.msra.mxu0 %v641
        %723 = vmatprep.subr.bf16.mxu0 0
        %724 = vmatpush1.bf16.msra.mxu0 %v642
        %725 = vmatprep.subr.bf16.mxu0 0
        %726 = vmatpush1.bf16.msra.mxu0 %v643
        %727 = vmatprep.subr.bf16.mxu0 0
        %728 = vmatpush1.bf16.msra.mxu0 %v644
        %729 = vmatprep.subr.bf16.mxu0 0
        %730 = vmatpush1.bf16.msra.mxu0 0
        %731 = vmatprep.subr.bf16.mxu0 0
        %732 = vmatpush1.bf16.msra.mxu0 0
        %733 = vmatprep.subr.bf16.mxu0 0
        %734 = vmatpush1.bf16.msra.mxu0 0
        %735 = vmatprep.subr.bf16.mxu0 0
        %736 = vmatpush1.bf16.msra.mxu0 0
        %737 = vmatprep.subr.bf16.mxu0 0
        %738 = vmatpush1.bf16.msra.mxu0 0
        %739 = vmatprep.subr.bf16.mxu0 0
        %740 = vmatpush1.bf16.msra.mxu0 0
        %741 = vmatprep.subr.bf16.mxu0 0
        %742 = vmatpush1.bf16.msra.mxu0 0
        %743 = vmatprep.subr.bf16.mxu0 0
        %744 = vmatpush1.bf16.msra.mxu0 0
        %745 = vmatprep.subr.bf16.mxu0 0
        %746 = vmatpush1.bf16.msra.mxu0 0
        %747 = vmatprep.subr.bf16.mxu0 0
        %748 = vmatpush1.bf16.msra.mxu0 0
        %749 = vmatprep.mubr.bf16.mxu0 0
        %750 = vmatmul.mubr.bf16.gmra.mrb[0].mxu0 %v715
        %v751 = vpop.f32.mrb[0].mxu0
        %v752 = vadd.f32 0.0, %v751
        %v753 = vpop.f32.mrb[0].mxu0
        %v754 = vpop.f32.mrb[0].mxu0
        %v755 = vpop.f32.mrb[0].mxu0
        %756 = vdwg.mxu0
        %757 = vmatprep.subr.bf16.mxu0 0
        %758 = vmatpush1.bf16.msra.mxu0 %v366
        %759 = vmatprep.subr.bf16.mxu0 0
        %760 = vmatpush1.bf16.msra.mxu0 %v367
        %761 = vmatprep.subr.bf16.mxu0 0
        %762 = vmatpush1.bf16.msra.mxu0 %v368
        %763 = vmatprep.subr.bf16.mxu0 0
        %764 = vmatpush1.bf16.msra.mxu0 %v369
        %765 = vmatprep.subr.bf16.mxu0 0
        %766 = vmatpush1.bf16.msra.mxu0 %v370
        %767 = vmatprep.subr.bf16.mxu0 0
        %768 = vmatpush1.bf16.msra.mxu0 %v371
        %769 = vmatprep.subr.bf16.mxu0 0
        %770 = vmatpush1.bf16.msra.mxu0 0
        %771 = vmatprep.subr.bf16.mxu0 0
        %772 = vmatpush1.bf16.msra.mxu0 0
        %773 = vmatprep.subr.bf16.mxu0 0
        %774 = vmatpush1.bf16.msra.mxu0 0
        %775 = vmatprep.subr.bf16.mxu0 0
        %776 = vmatpush1.bf16.msra.mxu0 0
        %777 = vmatprep.subr.bf16.mxu0 0
        %778 = vmatpush1.bf16.msra.mxu0 0
        %779 = vmatprep.subr.bf16.mxu0 0
        %780 = vmatpush1.bf16.msra.mxu0 0
        %781 = vmatprep.subr.bf16.mxu0 0
        %782 = vmatpush1.bf16.msra.mxu0 0
        %783 = vmatprep.subr.bf16.mxu0 0
        %784 = vmatpush1.bf16.msra.mxu0 0
        %785 = vmatprep.subr.bf16.mxu0 0
        %786 = vmatpush1.bf16.msra.mxu0 0
        %787 = vmatprep.subr.bf16.mxu0 0
        %788 = vmatpush1.bf16.msra.mxu0 0
        %789 = vmatprep.mubr.bf16.mxu0 0
        %790 = vmatmul.mubr.bf16.gmra.mrb[0].mxu0 %v715
        %v791 = vpop.f32.mrb[0].mxu0
        %v792 = vadd.f32 0.0, %v791
        %v793 = vpop.f32.mrb[0].mxu0
        %v794 = vpop.f32.mrb[0].mxu0
        %v795 = vpop.f32.mrb[0].mxu0
        %796 = vdwg.mxu0
        %v797 = vrcp.pop %v792
        %v798 = vmul.f32 %v752, %v797
        %v799 = vpack.c.bf16 %v798, %v798
        %v800 = vlaneseq
        %v801 = vshrl.u32 %v800, 7
        %v802 = vsub.s32 3, %v801
        %v803 = vrot.slane %v409, %v802
        %v816 = vunpack.c.l.b16 %v397
        %v817 = vunpack.c.l.b16 %v398
        %v818 = vunpack.c.l.b16 %v399
        %v819 = vunpack.c.l.b16 %v400
        %v820 = vunpack.c.l.b16 %v401
        %v821 = vunpack.c.l.b16 %v402
        %v822 = vunpack.c.l.b16 %v403
        %v823 = vunpack.c.l.b16 %v404
        %v824 = vunpack.c.l.b16 %v405
        %v825 = vunpack.c.l.b16 %v406
        %v826 = vunpack.c.l.b16 %v407
        %v827 = vunpack.c.l.b16 %v408
        %v828 = vpack.c.b16 %v817, %v816
        %v829 = vpack.c.b16 %v819, %v818
        %v830 = vpack.c.b16 %v821, %v820
        %v831 = vpack.c.b16 %v823, %v822
        %v832 = vpack.c.b16 %v825, %v824
        %v833 = vpack.c.b16 %v827, %v826
        %v841 = vsel %vm508, %v799, 0
        %843 = vmatprep.subr.bf16.mxu0 0
        %844 = vmatpush1.bf16.msra.mxu0 %v828
        %845 = vmatprep.subr.bf16.mxu0 0
        %846 = vmatpush1.bf16.msra.mxu0 %v829
        %847 = vmatprep.subr.bf16.mxu0 0
        %848 = vmatpush1.bf16.msra.mxu0 %v830
        %849 = vmatprep.subr.bf16.mxu0 0
        %850 = vmatpush1.bf16.msra.mxu0 %v831
        %851 = vmatprep.subr.bf16.mxu0 0
        %852 = vmatpush1.bf16.msra.mxu0 %v832
        %853 = vmatprep.subr.bf16.mxu0 0
        %854 = vmatpush1.bf16.msra.mxu0 %v833
        %855 = vmatprep.subr.bf16.mxu0 0
        %856 = vmatpush1.bf16.msra.mxu0 0
        %857 = vmatprep.subr.bf16.mxu0 0
        %858 = vmatpush1.bf16.msra.mxu0 0
        %859 = vmatprep.subr.bf16.mxu0 0
        %860 = vmatpush1.bf16.msra.mxu0 0
        %861 = vmatprep.subr.bf16.mxu0 0
        %862 = vmatpush1.bf16.msra.mxu0 0
        %863 = vmatprep.subr.bf16.mxu0 0
        %864 = vmatpush1.bf16.msra.mxu0 0
        %865 = vmatprep.subr.bf16.mxu0 0
        %866 = vmatpush1.bf16.msra.mxu0 0
        %867 = vmatprep.subr.bf16.mxu0 0
        %868 = vmatpush1.bf16.msra.mxu0 0
        %869 = vmatprep.subr.bf16.mxu0 0
        %870 = vmatpush1.bf16.msra.mxu0 0
        %871 = vmatprep.subr.bf16.mxu0 0
        %872 = vmatpush1.bf16.msra.mxu0 0
        %873 = vmatprep.subr.bf16.mxu0 0
        %874 = vmatpush1.bf16.msra.mxu0 0
        %875 = vmatprep.mubr.bf16.mxu0 0
        %876 = vmatmul.mubr.bf16.gmra.mrb[0].mxu0 %v841
        %v877 = vpop.f32.mrb[0].mxu0
        %v878 = vadd.f32 %v803, %v877
        %v879 = vpop.f32.mrb[0].mxu0
        %v880 = vpop.f32.mrb[0].mxu0
        %v881 = vpop.f32.mrb[0].mxu0
        %882 = vdwg.mxu0
        %v883 = vadd.f32 %v410, %v878
        %v884 = vsel %vm508, %v883, 0.0
        %885 = vadd.xlane.f32.xlu0 %v884
        %v886 = vpop.xlane.xlu0 %885
        %v887 = vrcp.pop 96.0
        %v888 = vmul.f32 %v886, %v887
        %v889 = vsub.f32 %v883, %v888
        %v890 = vmul.f32 %v889, %v889
        %v891 = vsel %vm508, %v890, 0.0
        %892 = vadd.xlane.f32.xlu0 %v891
        %v893 = vpop.xlane.xlu0 %892
        %v894 = vmul.f32 %v893, %v887
        %v895 = vadd.f32 %v894, 1e-05
        %v896 = vrsqrt.pop %v895
        %v897 = vmul.f32 %v889, %v896
        %v898 = vlaneseq
        %v899 = vshrl.u32 %v898, 7
        %v900 = vsub.s32 4, %v899
        %v901 = vrot.slane %v409, %v900
        %v902 = vmul.f32 %v897, %v901
        %v903 = vlaneseq
        %v904 = vshrl.u32 %v903, 7
        %v905 = vsub.s32 5, %v904
        %v906 = vrot.slane %v409, %v905
        %v907 = vadd.f32 %v902, %v906
        %v908 = vadd.f32 %v907, %v353
        %v909 = vsel %vm508, %v908, 0.0
        %910 = vadd.xlane.f32.xlu0 %v909
        %v911 = vpop.xlane.xlu0 %910
        %v912 = vmul.f32 %v911, %v887
        %v913 = vsub.f32 %v908, %v912
        %v914 = vmul.f32 %v913, %v913
        %v915 = vsel %vm508, %v914, 0.0
        %916 = vadd.xlane.f32.xlu0 %v915
        %v917 = vpop.xlane.xlu0 %916
        %v918 = vmul.f32 %v917, %v887
        %v919 = vadd.f32 %v918, 1e-05
        %v920 = vrsqrt.pop %v919
        %v921 = vmul.f32 %v913, %v920
        %v922 = vmul.f32 %v921, %v901
        %v923 = vadd.f32 %v922, %v906
        %s924 = scalar_lea.vmem [#allocation5], 144
        %v925 = vld [vmem:[%s924] sm:$0xff]
        %v926 = vld [vmem:[%s924 + $0x8] sm:$0xf]
        %v927 = vld [vmem:[%s924 + $0xc] sm:$0xff]
        %v928 = vld [vmem:[%s924 + $0x14] sm:$0xf]
        %v929 = vld [vmem:[%s924 + $0x18] sm:$0xff]
        %v930 = vld [vmem:[%s924 + $0x20] sm:$0xf]
        %v931 = vld [vmem:[%s924 + $0x24] sm:$0xff]
        %v932 = vld [vmem:[%s924 + $0x2c] sm:$0xf]
        %v933 = vld [vmem:[%s924 + $0x30] sm:$0xff]
        %v934 = vld [vmem:[%s924 + $0x38] sm:$0xf]
        %v935 = vld [vmem:[%s924 + $0x3c] sm:$0xff]
        %v936 = vld [vmem:[%s924 + $0x44] sm:$0xf]
        %v937 = vld [vmem:[%s924 + $0x48] sm:$0xff]
        %v938 = vld [vmem:[%s924 + $0x50] sm:$0xf]
        %v939 = vld [vmem:[%s924 + $0x54] sm:$0xff]
        %v940 = vld [vmem:[%s924 + $0x5c] sm:$0xf]
        %v941 = vld [vmem:[%s924 + $0x60] sm:$0xff]
        %v942 = vld [vmem:[%s924 + $0x68] sm:$0xf]
        %v943 = vld [vmem:[%s924 + $0x6c] sm:$0xff]
        %v944 = vld [vmem:[%s924 + $0x74] sm:$0xf]
        %v945 = vld [vmem:[%s924 + $0x78] sm:$0xff]
        %v946 = vld [vmem:[%s924 + $0x80] sm:$0xf]
        %v947 = vld [vmem:[%s924 + $0x84] sm:$0xff]
        %v948 = vld [vmem:[%s924 + $0x8c] sm:$0xf]
        %s949 = scalar_lea.vmem [#allocation7], 48
        %v950 = vld [vmem:[%s949] sm:$0xf]
        %v951 = vld [vmem:[%s949 + $0x4] sm:$0xf]
        %v952 = vld [vmem:[%s949 + $0x8] sm:$0xf]
        %v953 = vld [vmem:[%s949 + $0xc] sm:$0xf]
        %v954 = vld [vmem:[%s949 + $0x10] sm:$0xf]
        %v955 = vld [vmem:[%s949 + $0x14] sm:$0xf]
        %v956 = vld [vmem:[%s949 + $0x18] sm:$0xf]
        %v957 = vld [vmem:[%s949 + $0x1c] sm:$0xf]
        %v958 = vld [vmem:[%s949 + $0x20] sm:$0xf]
        %v959 = vld [vmem:[%s949 + $0x24] sm:$0xf]
        %v960 = vld [vmem:[%s949 + $0x28] sm:$0xf]
        %v961 = vld [vmem:[%s949 + $0x2c] sm:$0xf]
        %s962 = scalar_lea.vmem %s343, 8
        %v963 = vld [vmem:[%s962] sm:$0x3f]
        %v964 = vadd.f32 %v923, %v353
        %v965 = vpack.c.bf16 %v964, %v964
        %v990 = vunpack.c.l.b16 %v925
        %v991 = vunpack.c.h.b16 %v925
        %v992 = vunpack.c.l.b16 %v926
        %v993 = vunpack.c.l.b16 %v927
        %v994 = vunpack.c.h.b16 %v927
        %v995 = vunpack.c.l.b16 %v928
        %v996 = vunpack.c.l.b16 %v929
        %v997 = vunpack.c.h.b16 %v929
        %v998 = vunpack.c.l.b16 %v930
        %v999 = vunpack.c.l.b16 %v931
        %v1000 = vunpack.c.h.b16 %v931
        %v1001 = vunpack.c.l.b16 %v932
        %v1002 = vunpack.c.l.b16 %v933
        %v1003 = vunpack.c.h.b16 %v933
        %v1004 = vunpack.c.l.b16 %v934
        %v1005 = vunpack.c.l.b16 %v935
        %v1006 = vunpack.c.h.b16 %v935
        %v1007 = vunpack.c.l.b16 %v936
        %v1008 = vunpack.c.l.b16 %v937
        %v1009 = vunpack.c.h.b16 %v937
        %v1010 = vunpack.c.l.b16 %v938
        %v1011 = vunpack.c.l.b16 %v939
        %v1012 = vunpack.c.h.b16 %v939
        %v1013 = vunpack.c.l.b16 %v940
        %v1014 = vunpack.c.l.b16 %v941
        %v1015 = vunpack.c.h.b16 %v941
        %v1016 = vunpack.c.l.b16 %v942
        %v1017 = vunpack.c.l.b16 %v943
        %v1018 = vunpack.c.h.b16 %v943
        %v1019 = vunpack.c.l.b16 %v944
        %v1020 = vunpack.c.l.b16 %v945
        %v1021 = vunpack.c.h.b16 %v945
        %v1022 = vunpack.c.l.b16 %v946
        %v1023 = vunpack.c.l.b16 %v947
        %v1024 = vunpack.c.h.b16 %v947
        %v1025 = vunpack.c.l.b16 %v948
        %v1026 = vpack.c.b16 %v993, %v990
        %v1027 = vpack.c.b16 %v994, %v991
        %v1028 = vpack.c.b16 %v995, %v992
        %v1029 = vpack.c.b16 %v999, %v996
        %v1030 = vpack.c.b16 %v1000, %v997
        %v1031 = vpack.c.b16 %v1001, %v998
        %v1032 = vpack.c.b16 %v1005, %v1002
        %v1033 = vpack.c.b16 %v1006, %v1003
        %v1034 = vpack.c.b16 %v1007, %v1004
        %v1035 = vpack.c.b16 %v1011, %v1008
        %v1036 = vpack.c.b16 %v1012, %v1009
        %v1037 = vpack.c.b16 %v1013, %v1010
        %v1038 = vpack.c.b16 %v1017, %v1014
        %v1039 = vpack.c.b16 %v1018, %v1015
        %v1040 = vpack.c.b16 %v1019, %v1016
        %v1041 = vpack.c.b16 %v1023, %v1020
        %v1042 = vpack.c.b16 %v1024, %v1021
        %v1043 = vpack.c.b16 %v1025, %v1022
        %v1063 = vsel %vm508, %v965, 0
        %1065 = vmatprep.subr.bf16.mxu0 %v1027
        %1066 = vmatpush1.bf16.msra.mxu0 %v1026
        %1067 = vmatprep.subr.bf16.mxu0 %v1030
        %1068 = vmatpush1.bf16.msra.mxu0 %v1029
        %1069 = vmatprep.subr.bf16.mxu0 %v1033
        %1070 = vmatpush1.bf16.msra.mxu0 %v1032
        %1071 = vmatprep.subr.bf16.mxu0 %v1036
        %1072 = vmatpush1.bf16.msra.mxu0 %v1035
        %1073 = vmatprep.subr.bf16.mxu0 %v1039
        %1074 = vmatpush1.bf16.msra.mxu0 %v1038
        %1075 = vmatprep.subr.bf16.mxu0 %v1042
        %1076 = vmatpush1.bf16.msra.mxu0 %v1041
        %1077 = vmatprep.subr.bf16.mxu0 0
        %1078 = vmatpush1.bf16.msra.mxu0 0
        %1079 = vmatprep.subr.bf16.mxu0 0
        %1080 = vmatpush1.bf16.msra.mxu0 0
        %1081 = vmatprep.subr.bf16.mxu0 0
        %1082 = vmatpush1.bf16.msra.mxu0 0
        %1083 = vmatprep.subr.bf16.mxu0 0
        %1084 = vmatpush1.bf16.msra.mxu0 0
        %1085 = vmatprep.subr.bf16.mxu0 0
        %1086 = vmatpush1.bf16.msra.mxu0 0
        %1087 = vmatprep.subr.bf16.mxu0 0
        %1088 = vmatpush1.bf16.msra.mxu0 0
        %1089 = vmatprep.subr.bf16.mxu0 0
        %1090 = vmatpush1.bf16.msra.mxu0 0
        %1091 = vmatprep.subr.bf16.mxu0 0
        %1092 = vmatpush1.bf16.msra.mxu0 0
        %1093 = vmatprep.subr.bf16.mxu0 0
        %1094 = vmatpush1.bf16.msra.mxu0 0
        %1095 = vmatprep.subr.bf16.mxu0 0
        %1096 = vmatpush1.bf16.msra.mxu0 0
        %1097 = vmatprep.mubr.bf16.mxu0 0
        %1098 = vmatmul.mubr.bf16.gmra.mrb[0].mxu0 %v1063
        %v1099 = vpop.f32.mrb[0].mxu0
        %v1100 = vadd.f32 0.0, %v1099
        %v1101 = vpop.f32.mrb[0].mxu0
        %v1102 = vadd.f32 0.0, %v1101
        %v1103 = vpop.f32.mrb[0].mxu0
        %v1104 = vpop.f32.mrb[0].mxu0
        %1105 = vdwg.mxu0
        %1106 = vmatprep.subr.bf16.mxu0 0
        %1107 = vmatpush1.bf16.msra.mxu0 %v1028
        %1108 = vmatprep.subr.bf16.mxu0 0
        %1109 = vmatpush1.bf16.msra.mxu0 %v1031
        %1110 = vmatprep.subr.bf16.mxu0 0
        %1111 = vmatpush1.bf16.msra.mxu0 %v1034
        %1112 = vmatprep.subr.bf16.mxu0 0
        %1113 = vmatpush1.bf16.msra.mxu0 %v1037
        %1114 = vmatprep.subr.bf16.mxu0 0
        %1115 = vmatpush1.bf16.msra.mxu0 %v1040
        %1116 = vmatprep.subr.bf16.mxu0 0
        %1117 = vmatpush1.bf16.msra.mxu0 %v1043
        %1118 = vmatprep.subr.bf16.mxu0 0
        %1119 = vmatpush1.bf16.msra.mxu0 0
        %1120 = vmatprep.subr.bf16.mxu0 0
        %1121 = vmatpush1.bf16.msra.mxu0 0
        %1122 = vmatprep.subr.bf16.mxu0 0
        %1123 = vmatpush1.bf16.msra.mxu0 0
        %1124 = vmatprep.subr.bf16.mxu0 0
        %1125 = vmatpush1.bf16.msra.mxu0 0
        %1126 = vmatprep.subr.bf16.mxu0 0
        %1127 = vmatpush1.bf16.msra.mxu0 0
        %1128 = vmatprep.subr.bf16.mxu0 0
        %1129 = vmatpush1.bf16.msra.mxu0 0
        %1130 = vmatprep.subr.bf16.mxu0 0
        %1131 = vmatpush1.bf16.msra.mxu0 0
        %1132 = vmatprep.subr.bf16.mxu0 0
        %1133 = vmatpush1.bf16.msra.mxu0 0
        %1134 = vmatprep.subr.bf16.mxu0 0
        %1135 = vmatpush1.bf16.msra.mxu0 0
        %1136 = vmatprep.subr.bf16.mxu0 0
        %1137 = vmatpush1.bf16.msra.mxu0 0
        %1138 = vmatprep.mubr.bf16.mxu0 0
        %1139 = vmatmul.mubr.bf16.gmra.mrb[0].mxu0 %v1063
        %v1140 = vpop.f32.mrb[0].mxu0
        %v1141 = vadd.f32 0.0, %v1140
        %v1142 = vpop.f32.mrb[0].mxu0
        %v1143 = vpop.f32.mrb[0].mxu0
        %v1144 = vpop.f32.mrb[0].mxu0
        %1145 = vdwg.mxu0
        %v1146 = vlaneseq
        %v1147 = vshrl.u32 %v1146, 7
        %v1148 = vsub.s32 0, %v1147
        %v1149 = vrot.slane %v963, %v1148
        %v1150 = vadd.f32 %v1100, %v1149
        %v1151 = vmul.f32 %v1150, 0.35355338
        %v1152 = vlaneseq
        %v1153 = vshrl.u32 %v1152, 7
        %v1154 = vsub.s32 1, %v1153
        %v1155 = vrot.slane %v963, %v1154
        %v1156 = vadd.f32 %v1102, %v1155
        %v1157 = vlaneseq
        %v1158 = vshrl.u32 %v1157, 7
        %v1159 = vsub.s32 2, %v1158
        %v1160 = vrot.slane %v963, %v1159
        %v1161 = vadd.f32 %v1141, %v1160
        %v1162 = vmul.f32 %v1156, %v354
        %v1163 = vmul.f32 %v1156, %v355
        %v1164 = vmul.f32 %v1156, %v356
        %v1165 = vmul.f32 %v1156, %v357
        %v1166 = vmul.f32 %v1156, %v358
        %v1167 = vmul.f32 %v1156, %v359
        %v1168 = vmul.f32 %v1156, %v360
        %v1169 = vmul.f32 %v1156, %v361
        %v1170 = vmul.f32 %v1156, %v362
        %v1171 = vmul.f32 %v1156, %v363
        %v1172 = vmul.f32 %v1156, %v364
        %v1173 = vmul.f32 %v1156, %v365
        %v1174 = vpack.c.bf16 %v1163, %v1162
        %v1175 = vpack.c.bf16 %v1165, %v1164
        %v1176 = vpack.c.bf16 %v1167, %v1166
        %v1177 = vpack.c.bf16 %v1169, %v1168
        %v1178 = vpack.c.bf16 %v1171, %v1170
        %v1179 = vpack.c.bf16 %v1173, %v1172
        %v1180 = vmul.f32 %v1161, %v354
        %v1181 = vmul.f32 %v1161, %v355
        %v1182 = vmul.f32 %v1161, %v356
        %v1183 = vmul.f32 %v1161, %v357
        %v1184 = vmul.f32 %v1161, %v358
        %v1185 = vmul.f32 %v1161, %v359
        %v1186 = vmul.f32 %v1161, %v360
        %v1187 = vmul.f32 %v1161, %v361
        %v1188 = vmul.f32 %v1161, %v362
        %v1189 = vmul.f32 %v1161, %v363
        %v1190 = vmul.f32 %v1161, %v364
        %v1191 = vmul.f32 %v1161, %v365
        %v1192 = vpack.c.bf16 %v1181, %v1180
        %v1193 = vpack.c.bf16 %v1183, %v1182
        %v1194 = vpack.c.bf16 %v1185, %v1184
        %v1195 = vpack.c.bf16 %v1187, %v1186
        %v1196 = vpack.c.bf16 %v1189, %v1188
        %v1197 = vpack.c.bf16 %v1191, %v1190
        %v1198 = vpack.c.bf16 %v1151, %v1151
        %v1200 = vsel %vm508, %v1198, 0
        %v1203 = vsel %vm508, %v1174, 0
        %v1206 = vsel %vm508, %v1175, 0
        %v1209 = vsel %vm508, %v1176, 0
        %v1212 = vsel %vm508, %v1177, 0
        %v1215 = vsel %vm508, %v1178, 0
        %v1218 = vsel %vm508, %v1179, 0
        %1220 = vmatprep.subr.bf16.mxu0 0
        %1221 = vmatpush1.bf16.xpose.msra.mxu0 %v1203
        %1222 = vmatprep.subr.bf16.mxu0 0
        %1223 = vmatpush1.bf16.xpose.msra.mxu0 %v1206
        %1224 = vmatprep.subr.bf16.mxu0 0
        %1225 = vmatpush1.bf16.xpose.msra.mxu0 %v1209
        %1226 = vmatprep.subr.bf16.mxu0 0
        %1227 = vmatpush1.bf16.xpose.msra.mxu0 %v1212
        %1228 = vmatprep.subr.bf16.mxu0 0
        %1229 = vmatpush1.bf16.xpose.msra.mxu0 %v1215
        %1230 = vmatprep.subr.bf16.mxu0 0
        %1231 = vmatpush1.bf16.xpose.msra.mxu0 %v1218
        %1232 = vmatprep.subr.bf16.mxu0 0
        %1233 = vmatpush1.bf16.xpose.msra.mxu0 0
        %1234 = vmatprep.subr.bf16.mxu0 0
        %1235 = vmatpush1.bf16.xpose.msra.mxu0 0
        %1236 = vmatprep.subr.bf16.mxu0 0
        %1237 = vmatpush1.bf16.xpose.msra.mxu0 0
        %1238 = vmatprep.subr.bf16.mxu0 0
        %1239 = vmatpush1.bf16.xpose.msra.mxu0 0
        %1240 = vmatprep.subr.bf16.mxu0 0
        %1241 = vmatpush1.bf16.xpose.msra.mxu0 0
        %1242 = vmatprep.subr.bf16.mxu0 0
        %1243 = vmatpush1.bf16.xpose.msra.mxu0 0
        %1244 = vmatprep.subr.bf16.mxu0 0
        %1245 = vmatpush1.bf16.xpose.msra.mxu0 0
        %1246 = vmatprep.subr.bf16.mxu0 0
        %1247 = vmatpush1.bf16.xpose.msra.mxu0 0
        %1248 = vmatprep.subr.bf16.mxu0 0
        %1249 = vmatpush1.bf16.xpose.msra.mxu0 0
        %1250 = vmatprep.subr.bf16.mxu0 0
        %1251 = vmatpush1.bf16.xpose.msra.mxu0 0
        %1252 = vmatprep.mubr.bf16.mxu0 0
        %1253 = vmatmul.mubr.bf16.gmra.mrb[0].mxu0 %v1200
        %v1254 = vpop.f32.mrb[0].mxu0
        %v1255 = vadd.f32 0.0, %v1254
        %v1256 = vpop.f32.mrb[0].mxu0
        %v1257 = vpop.f32.mrb[0].mxu0
        %v1258 = vpop.f32.mrb[0].mxu0
        %1259 = vdwg.mxu0
        %v1260 = vsel %vm508, %v1255, -inf
        %1261 = vmax.xlane.f32.xlu0 %v1260
        %v1262 = vpop.xlane.xlu0 %1261
        %v1263 = vsub.f32 %v1255, %v1262
        %v1264 = vmul.f32 %v1263, 1.442695
        %v1265 = vpow.pop %v1264
        %v1266 = vpack.c.bf16 %v1265, %v1265
        %v1268 = vsel %vm508, %v1266, 0
        %1270 = vmatprep.subr.bf16.mxu0 0
        %1271 = vmatpush1.bf16.msra.mxu0 %v1192
        %1272 = vmatprep.subr.bf16.mxu0 0
        %1273 = vmatpush1.bf16.msra.mxu0 %v1193
        %1274 = vmatprep.subr.bf16.mxu0 0
        %1275 = vmatpush1.bf16.msra.mxu0 %v1194
        %1276 = vmatprep.subr.bf16.mxu0 0
        %1277 = vmatpush1.bf16.msra.mxu0 %v1195
        %1278 = vmatprep.subr.bf16.mxu0 0
        %1279 = vmatpush1.bf16.msra.mxu0 %v1196
        %1280 = vmatprep.subr.bf16.mxu0 0
        %1281 = vmatpush1.bf16.msra.mxu0 %v1197
        %1282 = vmatprep.subr.bf16.mxu0 0
        %1283 = vmatpush1.bf16.msra.mxu0 0
        %1284 = vmatprep.subr.bf16.mxu0 0
        %1285 = vmatpush1.bf16.msra.mxu0 0
        %1286 = vmatprep.subr.bf16.mxu0 0
        %1287 = vmatpush1.bf16.msra.mxu0 0
        %1288 = vmatprep.subr.bf16.mxu0 0
        %1289 = vmatpush1.bf16.msra.mxu0 0
        %1290 = vmatprep.subr.bf16.mxu0 0
        %1291 = vmatpush1.bf16.msra.mxu0 0
        %1292 = vmatprep.subr.bf16.mxu0 0
        %1293 = vmatpush1.bf16.msra.mxu0 0
        %1294 = vmatprep.subr.bf16.mxu0 0
        %1295 = vmatpush1.bf16.msra.mxu0 0
        %1296 = vmatprep.subr.bf16.mxu0 0
        %1297 = vmatpush1.bf16.msra.mxu0 0
        %1298 = vmatprep.subr.bf16.mxu0 0
        %1299 = vmatpush1.bf16.msra.mxu0 0
        %1300 = vmatprep.subr.bf16.mxu0 0
        %1301 = vmatpush1.bf16.msra.mxu0 0
        %1302 = vmatprep.mubr.bf16.mxu0 0
        %1303 = vmatmul.mubr.bf16.gmra.mrb[0].mxu0 %v1268
        %v1304 = vpop.f32.mrb[0].mxu0
        %v1305 = vadd.f32 0.0, %v1304
        %v1306 = vpop.f32.mrb[0].mxu0
        %v1307 = vpop.f32.mrb[0].mxu0
        %v1308 = vpop.f32.mrb[0].mxu0
        %1309 = vdwg.mxu0
        %1310 = vmatprep.subr.bf16.mxu0 0
        %1311 = vmatpush1.bf16.msra.mxu0 %v366
        %1312 = vmatprep.subr.bf16.mxu0 0
        %1313 = vmatpush1.bf16.msra.mxu0 %v367
        %1314 = vmatprep.subr.bf16.mxu0 0
        %1315 = vmatpush1.bf16.msra.mxu0 %v368
        %1316 = vmatprep.subr.bf16.mxu0 0
        %1317 = vmatpush1.bf16.msra.mxu0 %v369
        %1318 = vmatprep.subr.bf16.mxu0 0
        %1319 = vmatpush1.bf16.msra.mxu0 %v370
        %1320 = vmatprep.subr.bf16.mxu0 0
        %1321 = vmatpush1.bf16.msra.mxu0 %v371
        %1322 = vmatprep.subr.bf16.mxu0 0
        %1323 = vmatpush1.bf16.msra.mxu0 0
        %1324 = vmatprep.subr.bf16.mxu0 0
        %1325 = vmatpush1.bf16.msra.mxu0 0
        %1326 = vmatprep.subr.bf16.mxu0 0
        %1327 = vmatpush1.bf16.msra.mxu0 0
        %1328 = vmatprep.subr.bf16.mxu0 0
        %1329 = vmatpush1.bf16.msra.mxu0 0
        %1330 = vmatprep.subr.bf16.mxu0 0
        %1331 = vmatpush1.bf16.msra.mxu0 0
        %1332 = vmatprep.subr.bf16.mxu0 0
        %1333 = vmatpush1.bf16.msra.mxu0 0
        %1334 = vmatprep.subr.bf16.mxu0 0
        %1335 = vmatpush1.bf16.msra.mxu0 0
        %1336 = vmatprep.subr.bf16.mxu0 0
        %1337 = vmatpush1.bf16.msra.mxu0 0
        %1338 = vmatprep.subr.bf16.mxu0 0
        %1339 = vmatpush1.bf16.msra.mxu0 0
        %1340 = vmatprep.subr.bf16.mxu0 0
        %1341 = vmatpush1.bf16.msra.mxu0 0
        %1342 = vmatprep.mubr.bf16.mxu0 0
        %1343 = vmatmul.mubr.bf16.gmra.mrb[0].mxu0 %v1268
        %v1344 = vpop.f32.mrb[0].mxu0
        %v1345 = vadd.f32 0.0, %v1344
        %v1346 = vpop.f32.mrb[0].mxu0
        %v1347 = vpop.f32.mrb[0].mxu0
        %v1348 = vpop.f32.mrb[0].mxu0
        %1349 = vdwg.mxu0
        %v1350 = vrcp.pop %v1345
        %v1351 = vmul.f32 %v1305, %v1350
        %v1352 = vpack.c.bf16 %v1351, %v1351
        %v1353 = vlaneseq
        %v1354 = vshrl.u32 %v1353, 7
        %v1355 = vsub.s32 3, %v1354
        %v1356 = vrot.slane %v963, %v1355
        %v1369 = vunpack.c.l.b16 %v950
        %v1370 = vunpack.c.l.b16 %v951
        %v1371 = vunpack.c.l.b16 %v952
        %v1372 = vunpack.c.l.b16 %v953
        %v1373 = vunpack.c.l.b16 %v954
        %v1374 = vunpack.c.l.b16 %v955
        %v1375 = vunpack.c.l.b16 %v956
        %v1376 = vunpack.c.l.b16 %v957
        %v1377 = vunpack.c.l.b16 %v958
        %v1378 = vunpack.c.l.b16 %v959
        %v1379 = vunpack.c.l.b16 %v960
        %v1380 = vunpack.c.l.b16 %v961
        %v1381 = vpack.c.b16 %v1370, %v1369
        %v1382 = vpack.c.b16 %v1372, %v1371
        %v1383 = vpack.c.b16 %v1374, %v1373
        %v1384 = vpack.c.b16 %v1376, %v1375
        %v1385 = vpack.c.b16 %v1378, %v1377
        %v1386 = vpack.c.b16 %v1380, %v1379
        %v1394 = vsel %vm508, %v1352, 0
        %1396 = vmatprep.subr.bf16.mxu0 0
        %1397 = vmatpush1.bf16.msra.mxu0 %v1381
        %1398 = vmatprep.subr.bf16.mxu0 0
        %1399 = vmatpush1.bf16.msra.mxu0 %v1382
        %1400 = vmatprep.subr.bf16.mxu0 0
        %1401 = vmatpush1.bf16.msra.mxu0 %v1383
        %1402 = vmatprep.subr.bf16.mxu0 0
        %1403 = vmatpush1.bf16.msra.mxu0 %v1384
        %1404 = vmatprep.subr.bf16.mxu0 0
        %1405 = vmatpush1.bf16.msra.mxu0 %v1385
        %1406 = vmatprep.subr.bf16.mxu0 0
        %1407 = vmatpush1.bf16.msra.mxu0 %v1386
        %1408 = vmatprep.subr.bf16.mxu0 0
        %1409 = vmatpush1.bf16.msra.mxu0 0
        %1410 = vmatprep.subr.bf16.mxu0 0
        %1411 = vmatpush1.bf16.msra.mxu0 0
        %1412 = vmatprep.subr.bf16.mxu0 0
        %1413 = vmatpush1.bf16.msra.mxu0 0
        %1414 = vmatprep.subr.bf16.mxu0 0
        %1415 = vmatpush1.bf16.msra.mxu0 0
        %1416 = vmatprep.subr.bf16.mxu0 0
        %1417 = vmatpush1.bf16.msra.mxu0 0
        %1418 = vmatprep.subr.bf16.mxu0 0
        %1419 = vmatpush1.bf16.msra.mxu0 0
        %1420 = vmatprep.subr.bf16.mxu0 0
        %1421 = vmatpush1.bf16.msra.mxu0 0
        %1422 = vmatprep.subr.bf16.mxu0 0
        %1423 = vmatpush1.bf16.msra.mxu0 0
        %1424 = vmatprep.subr.bf16.mxu0 0
        %1425 = vmatpush1.bf16.msra.mxu0 0
        %1426 = vmatprep.subr.bf16.mxu0 0
        %1427 = vmatpush1.bf16.msra.mxu0 0
        %1428 = vmatprep.mubr.bf16.mxu0 0
        %1429 = vmatmul.mubr.bf16.gmra.mrb[0].mxu0 %v1394
        %v1430 = vpop.f32.mrb[0].mxu0
        %v1431 = vadd.f32 %v1356, %v1430
        %v1432 = vpop.f32.mrb[0].mxu0
        %v1433 = vpop.f32.mrb[0].mxu0
        %v1434 = vpop.f32.mrb[0].mxu0
        %1435 = vdwg.mxu0
        %v1436 = vadd.f32 %v964, %v1431
        %v1437 = vsel %vm508, %v1436, 0.0
        %1438 = vadd.xlane.f32.xlu0 %v1437
        %v1439 = vpop.xlane.xlu0 %1438
        %v1440 = vmul.f32 %v1439, %v887
        %v1441 = vsub.f32 %v1436, %v1440
        %v1442 = vmul.f32 %v1441, %v1441
        %v1443 = vsel %vm508, %v1442, 0.0
        %1444 = vadd.xlane.f32.xlu0 %v1443
        %v1445 = vpop.xlane.xlu0 %1444
        %v1446 = vmul.f32 %v1445, %v887
        %v1447 = vadd.f32 %v1446, 1e-05
        %v1448 = vrsqrt.pop %v1447
        %v1449 = vmul.f32 %v1441, %v1448
        %v1450 = vlaneseq
        %v1451 = vshrl.u32 %v1450, 7
        %v1452 = vsub.s32 4, %v1451
        %v1453 = vrot.slane %v963, %v1452
        %v1454 = vmul.f32 %v1449, %v1453
        %v1455 = vlaneseq
        %v1456 = vshrl.u32 %v1455, 7
        %v1457 = vsub.s32 5, %v1456
        %v1458 = vrot.slane %v963, %v1457
        %v1459 = vadd.f32 %v1454, %v1458
        %v1460 = vadd.f32 %v1459, %v353
        %v1461 = vsel %vm508, %v1460, 0.0
        %1462 = vadd.xlane.f32.xlu0 %v1461
        %v1463 = vpop.xlane.xlu0 %1462
        %v1464 = vmul.f32 %v1463, %v887
        %v1465 = vsub.f32 %v1460, %v1464
        %v1466 = vmul.f32 %v1465, %v1465
        %v1467 = vsel %vm508, %v1466, 0.0
        %1468 = vadd.xlane.f32.xlu0 %v1467
        %v1469 = vpop.xlane.xlu0 %1468
        %v1470 = vmul.f32 %v1469, %v887
        %v1471 = vadd.f32 %v1470, 1e-05
        %v1472 = vrsqrt.pop %v1471
        %v1473 = vmul.f32 %v1465, %v1472
        %v1474 = vmul.f32 %v1473, %v1453
        %v1475 = vadd.f32 %v1474, %v1458
        %1476 = vst.msk [vmem:[%s332] sm:$0xff] %vm508, %v1475
        %s1477 = sand.u32 %s188, 1
        %s1478 = scalar_lea.sflag [#allocation4], %s1477
        %s1479 = sand.u32 %s188, 1
        %s1480 = smul.addr %s1479, 8
        %s1481 = scalar_lea.vmem [#allocation8], %s1480
        // Predicated region
        $region61: #{tpu_custom_call.1} parent=43 // pred_check
          %p1482 = pneg %p198
        $region62: #{tpu_custom_call.1} parent=43 // pred_check_branch
          %1484 = sbr.rel (%p1482) target = $region64
        $region63: #{tpu_custom_call.1} parent=43 // pred_region
          %s1486 = ssub.s32 128, 128
          %1487 = vsyncadd %s1478, %s1486
          %s1488 = smul.addr %s26, 128
          %s1489 = scalar_lea.hbm %s6, %s1488
          %s1491 = sshll.u32 %s1481, 4
          %s1492 = int_to_ptr.vmem [resolvable:$true] %s1491
          %1494 = dma.vmem_to_hbm [thread:$0]  %s1492, 128, %s1489, %s1478
        $region64: #{tpu_custom_call.1} parent=43 // pred_fallthru
          _
      $region44: #{tpu_custom_call.1} parent=5 // pred_fallthru
        _
      %p1495 = scmp.le.s32.totalorder 2, %s17
      // Predicated region
      $region65: #{tpu_custom_call.1} parent=5 // pred_check
        %p1496 = pneg %p1495
      $region66: #{tpu_custom_call.1} parent=5 // pred_check_branch
        %1498 = sbr.rel (%p1496) target = $region68
      $region67: #{tpu_custom_call.1} parent=5 // pred_region
        %s1499 = ssub.s32 %s17, 2
        // Predicated region
        $region69: #{tpu_custom_call.1} parent=67 // pred_check
          %p1500 = pneg %p204
        $region70: #{tpu_custom_call.1} parent=67 // pred_check_branch
          %1502 = sbr.rel (%p1500) target = $region72
        $region71: #{tpu_custom_call.1} parent=67 // pred_region
          %s1503 = sand.u32 %s189, 1
          %s1504 = scalar_lea.sflag [#allocation4], %s1503
          %s1505 = sand.u32 %s189, 1
          %s1506 = smul.addr %s1505, 8
          %s1507 = scalar_lea.vmem [#allocation8], %s1506
          %1508 = dma.done %s1504, 128
        $region72: #{tpu_custom_call.1} parent=67 // pred_fallthru
          _
      $region68: #{tpu_custom_call.1} parent=5 // pred_fallthru
        _
    $region6: #{tpu_custom_call.1} parent=1 // loop_footer
      %s21 = sadd.s32 1, %s17
    $region7: #{tpu_custom_call.1} parent=1 // loop_footer_branch
      %16 = sbr.rel target = $region3
    $region8: #{tpu_custom_call.1} parent=1 // loop_exit
      _
    %1509 = vsyncpa [#allocation3], 1
    %s1510 = scalar_lea.sflag [#allocation3], 1
    %1511 = vsyncpa %s1510, 1
    %1512 = vsyncpa [#allocation6], 1
    %1513 = vsyncpa [#allocation4], 1
    %s1514 = scalar_lea.sflag [#allocation4], 1
    %1515 = vsyncpa %s1514, 1

</llo_original>
